<compile_context>
chip_gen: v7x
topology: tpu7x:2x2x1
jax: 0.10.0
libtpu: 0.0.40
codegen_flags: <defaults>
</compile_context>

<pallas_src>
import functools
import math

import numpy as np
import jax
import jax.numpy as jnp
from jax.experimental import pallas as pl
from jax.experimental.pallas import tpu as pltpu

# ----- problem sizes (small, consistent with the module) -----
T = 2              # num_task
L = 2              # num_layer (each post-model has L Linear(7,4) layers)
H = 32             # hidden_size
WN = 28            # numel(weight) of Linear(7,4)
BN = 4             # numel(bias)
GS = WN + BN       # per-layer gradient size (32)  (== H, relied on by output packing)
N = T * L          # number of graph nodes
EM0, EM1 = 24, 16  # edge_middle_size (edge MLP: 2H -> EM0 -> EM1 -> H)
NM0 = 16           # node_middle_size (output MLP: H -> NM0 -> GS)
LANES = 128
P_T = L * (T * (T - 1)) // 2      # number of task edges that get updated
P_L = T * (L * (L - 1)) // 2      # number of layer edges that get updated
P = P_T + P_L

# the packed-buffer layout below relies on these coincidences of the small config
assert GS == H and 4 * H == LANES and 2 * P == 8
assert T * T * L == 8 and T * L * L == 8 and 2 * N == 8

_PC = 10.0
_EPS = 1e-6


# ---------------- in-kernel helpers (pure jnp, traced into the kernel) ----------------
def _sign(x):
    return jnp.where(x > 0, 1.0, jnp.where(x < 0, -1.0, 0.0))


def _preprocess(x):
    ind = (jnp.abs(x) > math.exp(-_PC)).astype(jnp.float32)
    x1 = jnp.log(jnp.abs(x) + _EPS) / _PC * ind - (1.0 - ind)
    x2 = _sign(x) * ind + math.exp(_PC) * x * (1.0 - ind)
    return jnp.concatenate([x1, x2], axis=-1)


def _lstm(x, h, c, w_cat, b):
    # fused input/hidden matmul; gate layout (i, f, o | g): one contiguous sigmoid
    # range [0:3H] and one tanh range [3H:4H].
    z = jnp.dot(jnp.concatenate([x, h], axis=-1), w_cat,
                preferred_element_type=jnp.float32) + b
    sg = jax.nn.sigmoid(z[:, 0:3 * H])
    g = jnp.tanh(z[:, 3 * H:4 * H])
    i, f, o = sg[:, 0:H], sg[:, H:2 * H], sg[:, 2 * H:3 * H]
    c_new = f * c + i * g
    return o * jnp.tanh(c_new), c_new


def _out_mlp(h, w0, b0, w1, b1):
    t = jnp.tanh(jnp.dot(h, w0, preferred_element_type=jnp.float32) + b0)
    return jnp.tanh(jnp.dot(t, w1, preferred_element_type=jnp.float32) + b1)


# ---------------- static graph-structure tables (host-side numpy) ----------------
def _static_tables():
    # pair order follows the reference loops exactly
    task_pairs = [(i, k, j) for j in range(L) for i in range(T) for k in range(i)]
    layer_pairs = [(i, j, k) for i in range(T) for j in range(L) for k in range(j)]
    pairs = task_pairs + layer_pairs

    # SELAB: rows 0:P select the "first" endpoint of each pair, rows P:2P the "second"
    selab = np.zeros((2 * P, 8), np.float32)
    for p, pr in enumerate(pairs):
        if p < P_T:
            i, k, j = pr
            a, b = i * L + j, k * L + j
        else:
            i, j, k = pr
            a, b = i * L + j, i * L + k
        selab[p, a] = 1.0
        selab[P + p, b] = 1.0

    # SCAT: scatter pair-mask rows (+ the implicit "ones" row at column P) into the
    # flattened mask tables (rows 0:TTL = task table, rows TTL: = layer table)
    scat = np.zeros((T * T * L + T * L * L, 8), np.float32)
    for r in range(T * T * L):
        i, k, j = r // (T * L), (r // L) % T, r % L
        if k < i:
            scat[r, task_pairs.index((i, k, j))] = 1.0
        else:
            scat[r, P] = 1.0
    for r in range(T * L * L):
        i, j, k = r // (L * L), (r // L) % L, r % L
        if k < j:
            scat[T * T * L + r, P_T + layer_pairs.index((i, j, k))] = 1.0
        else:
            scat[T * T * L + r, P] = 1.0

    # task-level propagation scatter (pair contributions -> nodes); layer pairs get
    # all-zero columns (they do not take part in task-level propagation)
    scatter_full = np.zeros((N, 2 * P), np.float32)
    for p, (i, k, j) in enumerate(task_pairs):
        scatter_full[i * L + j, p] = 1.0       # mask_p * h[k-node] accumulates into i-node
        scatter_full[k * L + j, P + p] = 1.0   # mask_p * h[i-node] accumulates into k-node

    # layer-level propagation = per-task mean over layers (edge_layer_mask_value is
    # all-ones in the reference); fold that mean into both propagation matrices
    avg = np.zeros((N, N), np.float32)
    for i in range(T):
        for j in range(L):
            for l in range(L):
                avg[i * L + j, i * L + l] = 1.0 / L
    avg8 = np.zeros((8, 8), np.float32)
    avg8[0:N, 0:N] = avg
    avgps8 = np.zeros((8, 8), np.float32)
    avgps8[0:N, 0:2 * P] = avg @ scatter_full
    return selab, scat, avg8, avgps8


# ---------------- host-side parameter packing: one flat (R,128) f32 buffer ----------------
def _pack_params(params):
    chunks, offs = [], {}
    row = 0

    def add(name, arr):
        nonlocal row
        arr = jnp.asarray(arr, jnp.float32)
        r, c = arr.shape
        rp = ((r + 7) // 8) * 8
        blk = jnp.zeros((rp, LANES), jnp.float32).at[:r, :c].set(arr)
        offs[name] = (row, r, c)
        chunks.append(blk)
        row += rp

    # block-diagonal (task | layer) edge-updater MLP, padded to 128 lanes
    ew0 = jnp.zeros((4 * H, LANES), jnp.float32)
    ew0 = ew0.at[0:2 * H, 0:EM0].set(params["te_w0"]).at[2 * H:4 * H, EM0:2 * EM0].set(params["le_w0"])
    add("EW0", ew0)
    ew1 = jnp.zeros((LANES, LANES), jnp.float32)
    ew1 = ew1.at[0:EM0, 0:EM1].set(params["te_w1"]).at[EM0:2 * EM0, EM1:2 * EM1].set(params["le_w1"])
    add("EW1", ew1)
    ew2 = jnp.zeros((LANES, LANES), jnp.float32)
    ew2 = ew2.at[0:EM1, 0:H].set(params["te_w2"]).at[EM1:2 * EM1, H:2 * H].set(params["le_w2"])
    add("EW2", ew2)
    # fused LSTM weights: [wx ; wh] so gates = [x|h] @ W + b (gate order i,f,o,g)
    add("LW0", jnp.concatenate([params["l0_wx"], params["l0_wh"]], axis=0))
    add("LW1", jnp.concatenate([params["l1_wx"], params["l1_wh"]], axis=0))
    # GenerateGradientLayer stack, padded to 128 lanes (O1 also row-padded to 128)
    add("O0", params["o0_w"])
    add("O1", jnp.zeros((LANES, LANES), jnp.float32).at[0:NM0, 0:GS].set(params["o1_w"]))
    # all biases in one 8x128 block, one row each
    bias = jnp.zeros((8, LANES), jnp.float32)
    bias = bias.at[0, 0:EM0].set(params["te_b0"]).at[0, EM0:2 * EM0].set(params["le_b0"])
    bias = bias.at[1, 0:EM1].set(params["te_b1"]).at[1, EM1:2 * EM1].set(params["le_b1"])
    bias = bias.at[2, 0:H].set(params["te_b2"]).at[2, H:2 * H].set(params["le_b2"])
    bias = bias.at[3, :].set(params["l0_b"]).at[4, :].set(params["l1_b"])
    bias = bias.at[5, 0:NM0].set(params["o0_b"]).at[6, 0:GS].set(params["o1_b"])
    add("BIAS", bias)
    # static graph-structure tables
    selab, scat, avg8, avgps8 = _static_tables()
    add("SELAB", selab)
    add("SCAT", scat)
    add("AVG8", avg8)
    add("AVGPS8", avgps8)
    return jnp.concatenate(chunks, axis=0), offs


# ---------------- the Pallas kernel: one invocation, everything resident in VMEM ----------------
def _gnog_kernel(offs, w_ref, s_ref, out_ref):
    def wfull(name):                       # full-128-lane weight chunk
        o, r, _ = offs[name]
        return w_ref[o:o + r, :]

    def wsmall(name):                      # true-shape tiny graph table
        o, r, c = offs[name]
        return w_ref[o:o + r, 0:c]

    def bias_row(k):                       # one (1,128) bias row
        o = offs["BIAS"][0]
        return w_ref[o + k:o + k + 1, :]

    st = s_ref[...]                                        # (8,128), single load
    gw = st[:, 0:WN]                                       # rows N:8 are zero padding
    gb = st[:, WN:GS]
    h0 = st[:, GS:GS + H]                                  # (8,H)
    c0 = st[:, GS + H:GS + 2 * H]

    # ---- update_edge('task_level') + update_edge('layer_level') ----------------
    # pre-update hidden states feed the edge MLPs; the loss factor cancels out.
    selab = wsmall("SELAB")                                             # (2P, 8)
    pair_h = jnp.dot(selab, h0, preferred_element_type=jnp.float32)     # (2P, H)
    pair_in = jnp.concatenate([pair_h[0:P, :], pair_h[P:2 * P, :]], axis=-1)   # (P, 2H)
    x_e = jnp.concatenate([pair_in, pair_in], axis=-1)                  # (P, 4H=128)
    e = jnp.tanh(jnp.dot(x_e, wfull("EW0"), preferred_element_type=jnp.float32) + bias_row(0))
    e = jnp.tanh(jnp.dot(e, wfull("EW1"), preferred_element_type=jnp.float32) + bias_row(1))
    e = jnp.tanh(jnp.dot(e, wfull("EW2"), preferred_element_type=jnp.float32) + bias_row(2))
    te_all = e[:, 0:H]            # task-edge MLP output for every pair row
    le_all = e[:, H:2 * H]        # layer-edge MLP output for every pair row

    # scatter pair masks (+ implicit ones for self / non-updated edges) into the
    # flattened mask tables with a single static 0/1 matmul
    masks8 = jnp.concatenate(
        [te_all[0:P_T, :], le_all[P_T:P, :],
         jnp.ones((1, H), jnp.float32), jnp.zeros((8 - P - 1, H), jnp.float32)], axis=0)
    tables = jnp.dot(wsmall("SCAT"), masks8, preferred_element_type=jnp.float32)   # (16, H)
    tmask_tbl = tables[0:T * T * L, :]
    lmask_tbl = tables[T * T * L:, :]

    # ---- update_node: two fused-matmul LSTM cells + intermediate grad regen ----
    xp0 = jnp.concatenate([_preprocess(gw), _preprocess(gb)], axis=-1)   # (8, 2*GS)
    h1, c1 = _lstm(xp0, h0, c0, wfull("LW0"), bias_row(3))
    g1 = _out_mlp(h1, wfull("O0"), bias_row(5), wfull("O1"), bias_row(6))[:, 0:GS]
    h2, c2 = _lstm(_preprocess(g1), h1, c1, wfull("LW1"), bias_row(4))
    # (the reference regenerates one more grad after the last LSTM layer and discards it)

    # ---- propagate('task_level') then propagate('layer_level') -----------------
    gath = jnp.dot(selab, h2, preferred_element_type=jnp.float32)        # (2P, H)
    contribs = jnp.concatenate([te_all, te_all], axis=0) * \
        jnp.concatenate([gath[P:2 * P, :], gath[0:P, :]], axis=0)         # (2P, H)
    h_fin = (jnp.dot(wsmall("AVG8"), h2, preferred_element_type=jnp.float32)
             + jnp.dot(wsmall("AVGPS8"), contribs, preferred_element_type=jnp.float32)) * (1.0 / T)

    # ---- output_grad() on the propagated hidden states --------------------------
    grads = _out_mlp(h_fin, wfull("O0"), bias_row(5), wfull("O1"), bias_row(6))[:, 0:GS]

    # one lane-dense (8,128) output slab -> a single unmasked full-row store
    col_gh = jnp.concatenate([grads[0:N, :], h_fin[0:N, :]], axis=0)       # (2N, H)
    col_c = jnp.concatenate([c2[0:N, :], jnp.zeros((8 - N, H), jnp.float32)], axis=0)
    out_ref[...] = jnp.concatenate([tmask_tbl, lmask_tbl, col_gh, col_c], axis=-1)


# ---------------- wrapper ----------------
def gnog_forward(loss, grads_w, grads_b, h0, c0, wbuf, offs):
    del loss  # cancels out in the reference forward (see header note)
    sbuf = jnp.zeros((8, LANES), jnp.float32)
    sbuf = sbuf.at[0:N, 0:WN].set(grads_w)
    sbuf = sbuf.at[0:N, WN:GS].set(grads_b)
    sbuf = sbuf.at[0:N, GS:GS + H].set(h0)
    sbuf = sbuf.at[0:N, GS + H:GS + 2 * H].set(c0)

    slab = pl.pallas_call(
        functools.partial(_gnog_kernel, offs),
        out_shape=jax.ShapeDtypeStruct((8, LANES), jnp.float32),
        in_specs=[pl.BlockSpec(memory_space=pltpu.MemorySpace.VMEM),
                  pl.BlockSpec(memory_space=pltpu.MemorySpace.VMEM)],
        out_specs=pl.BlockSpec(memory_space=pltpu.MemorySpace.VMEM),
        cost_estimate=pl.CostEstimate(flops=1_500_000, transcendentals=30_000,
                                      bytes_accessed=int(wbuf.size + 2 * 8 * LANES) * 4),
    )(wbuf, sbuf)

    task_mask = slab[:, 0:H].reshape(T, T, L, H)          # edge_task_mask_value of task edges
    layer_task_mask = slab[:, H:2 * H].reshape(T, L, L, H)  # edge_task_mask_value of layer edges
    new_grads = slab[0:N, 2 * H:3 * H]                    # regenerated per-node gradients (GS == H)
    h_new = slab[N:2 * N, 2 * H:3 * H]                    # post-propagation h
    c_new = slab[0:N, 3 * H:4 * H]                        # post-LSTM c (propagation never touches c)
    return new_grads, h_new, c_new, task_mask, layer_task_mask


# ---------------- deterministic parameter init (Xavier-normal weights, zero biases) ----------------
def _xavier(key, fan_in, fan_out):
    std = math.sqrt(2.0 / (fan_in + fan_out))
    return (std * jax.random.normal(key, (fan_in, fan_out))).astype(jnp.float32)


def init_params(key):
    ks = jax.random.split(key, 12)
    p = {}
    # task-edge updater MLP (shared by all task edges): 2H -> EM0 -> EM1 -> H
    p["te_w0"], p["te_b0"] = _xavier(ks[0], 2 * H, EM0), jnp.zeros((EM0,), jnp.float32)
    p["te_w1"], p["te_b1"] = _xavier(ks[1], EM0, EM1), jnp.zeros((EM1,), jnp.float32)
    p["te_w2"], p["te_b2"] = _xavier(ks[2], EM1, H), jnp.zeros((H,), jnp.float32)
    # layer-edge updater MLP (shared by all layer edges)
    p["le_w0"], p["le_b0"] = _xavier(ks[3], 2 * H, EM0), jnp.zeros((EM0,), jnp.float32)
    p["le_w1"], p["le_b1"] = _xavier(ks[4], EM0, EM1), jnp.zeros((EM1,), jnp.float32)
    p["le_w2"], p["le_b2"] = _xavier(ks[5], EM1, H), jnp.zeros((H,), jnp.float32)
    # NodeUpdater LSTM cells (shared by all nodes): input 2*GS, hidden H, gates (i,f,o,g)
    p["l0_wx"], p["l0_wh"] = _xavier(ks[6], 2 * GS, 4 * H), _xavier(ks[7], H, 4 * H)
    p["l0_b"] = jnp.zeros((4 * H,), jnp.float32)
    p["l1_wx"], p["l1_wh"] = _xavier(ks[8], 2 * GS, 4 * H), _xavier(ks[9], H, 4 * H)
    p["l1_b"] = jnp.zeros((4 * H,), jnp.float32)
    # GenerateGradientLayer stack (shared): H -> NM0 -> GS
    p["o0_w"], p["o0_b"] = _xavier(ks[10], H, NM0), jnp.zeros((NM0,), jnp.float32)
    p["o1_w"], p["o1_b"] = _xavier(ks[11], NM0, GS), jnp.zeros((GS,), jnp.float32)
    return p


if __name__ == "__main__":
    root = jax.random.PRNGKey(0)
    kp, kl, kw, kb = jax.random.split(root, 4)

    params = init_params(kp)
    wbuf, offs = _pack_params(params)

    # synthetic per-task losses and per-node (task, layer) model gradients
    loss = jax.random.normal(kl, (T,), jnp.float32)
    grads_w = 0.5 * jax.random.normal(kw, (N, WN), jnp.float32)     # exercises |x| >  e^-10 branch
    grads_b = 1e-6 * jax.random.normal(kb, (N, BN), jnp.float32)    # exercises |x| <= e^-10 branch
    h0 = jnp.zeros((N, H), jnp.float32)                             # Node init state
    c0 = jnp.zeros((N, H), jnp.float32)

    outs = gnog_forward(loss, grads_w, grads_b, h0, c0, wbuf, offs)
    outs = jax.block_until_ready(outs)
    new_grads, h_new, c_new, task_mask, layer_task_mask = outs

    assert new_grads.shape == (N, GS)
    assert h_new.shape == (N, H) and c_new.shape == (N, H)
    assert task_mask.shape == (T, T, L, H) and layer_task_mask.shape == (T, L, L, H)

    # structural sanity checks that follow directly from the reference semantics
    tm_np = np.asarray(task_mask)
    lm_np = np.asarray(layer_task_mask)
    h_np = np.asarray(h_new)
    assert np.allclose(tm_np[0, 0], 1.0) and np.allclose(tm_np[1, 1], 1.0)   # self edges stay ones
    assert np.allclose(tm_np[0, 1], 1.0)                                     # non-updated edges stay ones
    assert np.allclose(lm_np[:, 0, 0], 1.0) and np.allclose(lm_np[:, 0, 1], 1.0)
    # layer-level propagation averages over layers -> identical h rows per task
    assert np.allclose(h_np[0], h_np[1], atol=1e-6)
    assert np.allclose(h_np[2], h_np[3], atol=1e-6)
    assert np.all(np.isfinite(np.asarray(new_grads)))
    assert np.all(np.isfinite(np.asarray(c_new)))
    print("KERNEL_OK")
</pallas_src>

<mosaic_0001>
module attributes {stable_mosaic.version = 11 : i64} {
  func.func @_gnog_kernel(%arg0: memref<784x128xf32, #tpu.memory_space<vmem>>, %arg1: memref<8x128xf32, #tpu.memory_space<vmem>>, %arg2: memref<8x128xf32, #tpu.memory_space<vmem>>) attributes {dimension_semantics = [], scalar_prefetch = 0 : i64, scratch_operands = 0 : i64, tpu.core_type = #tpu.core_type<tc>} {
    %c0 = arith.constant 0 : index
    %c0_0 = arith.constant 0 : index
    %0 = vector.load %arg1[%c0, %c0_0] : memref<8x128xf32, #tpu.memory_space<vmem>>, vector<8x128xf32>
    %1 = vector.extract_strided_slice %0 {offsets = [0, 0], sizes = [8, 28], strides = [1, 1]} : vector<8x128xf32> to vector<8x28xf32>
    %2 = vector.extract_strided_slice %0 {offsets = [0, 28], sizes = [8, 4], strides = [1, 1]} : vector<8x128xf32> to vector<8x4xf32>
    %3 = vector.extract_strided_slice %0 {offsets = [0, 32], sizes = [8, 32], strides = [1, 1]} : vector<8x128xf32> to vector<8x32xf32>
    %4 = vector.extract_strided_slice %0 {offsets = [0, 64], sizes = [8, 32], strides = [1, 1]} : vector<8x128xf32> to vector<8x32xf32>
    %c744 = arith.constant 744 : index
    %c0_1 = arith.constant 0 : index
    %5 = vector.load %arg0[%c744, %c0_1] : memref<784x128xf32, #tpu.memory_space<vmem>>, vector<8x8xf32>
    %cst = arith.constant dense<0.000000e+00> : vector<8x32xf32>
    %6 = tpu.matmul %5, %3, %cst {dimension_numbers = #tpu.dot_dimension_numbers<[1], [0], [0], [1], [0, 0, 1, 1], [], []>} : vector<8x8xf32>, vector<8x32xf32>, vector<8x32xf32> -> vector<8x32xf32>
    %7 = vector.extract_strided_slice %6 {offsets = [0, 0], sizes = [4, 32], strides = [1, 1]} : vector<8x32xf32> to vector<4x32xf32>
    %8 = vector.extract_strided_slice %6 {offsets = [4, 0], sizes = [4, 32], strides = [1, 1]} : vector<8x32xf32> to vector<4x32xf32>
    %9 = tpu.concatenate %7, %8 in 1 : vector<4x32xf32>, vector<4x32xf32> -> vector<4x64xf32>
    %10 = tpu.concatenate %9, %9 in 1 : vector<4x64xf32>, vector<4x64xf32> -> vector<4x128xf32>
    %c0_2 = arith.constant 0 : index
    %c0_3 = arith.constant 0 : index
    %11 = vector.load %arg0[%c0_2, %c0_3] : memref<784x128xf32, #tpu.memory_space<vmem>>, vector<128x128xf32>
    %cst_4 = arith.constant dense<0.000000e+00> : vector<4x128xf32>
    %12 = tpu.matmul %10, %11, %cst_4 {dimension_numbers = #tpu.dot_dimension_numbers<[1], [0], [0], [1], [0, 0, 1, 1], [], []>} : vector<4x128xf32>, vector<128x128xf32>, vector<4x128xf32> -> vector<4x128xf32>
    %c736 = arith.constant 736 : index
    %c0_5 = arith.constant 0 : index
    %13 = vector.load %arg0[%c736, %c0_5] : memref<784x128xf32, #tpu.memory_space<vmem>>, vector<1x128xf32>
    %14 = vector.broadcast %13 : vector<1x128xf32> to vector<4x128xf32>
    %15 = arith.addf %12, %14 : vector<4x128xf32>
    %16 = math.tanh %15 : vector<4x128xf32>
    %c128 = arith.constant 128 : index
    %c0_6 = arith.constant 0 : index
    %17 = vector.load %arg0[%c128, %c0_6] : memref<784x128xf32, #tpu.memory_space<vmem>>, vector<128x128xf32>
    %cst_7 = arith.constant dense<0.000000e+00> : vector<4x128xf32>
    %18 = tpu.matmul %16, %17, %cst_7 {dimension_numbers = #tpu.dot_dimension_numbers<[1], [0], [0], [1], [0, 0, 1, 1], [], []>} : vector<4x128xf32>, vector<128x128xf32>, vector<4x128xf32> -> vector<4x128xf32>
    %c737 = arith.constant 737 : index
    %c0_8 = arith.constant 0 : index
    %19 = vector.load %arg0[%c737, %c0_8] : memref<784x128xf32, #tpu.memory_space<vmem>>, vector<1x128xf32>
    %20 = vector.broadcast %19 : vector<1x128xf32> to vector<4x128xf32>
    %21 = arith.addf %18, %20 : vector<4x128xf32>
    %22 = math.tanh %21 : vector<4x128xf32>
    %c256 = arith.constant 256 : index
    %c0_9 = arith.constant 0 : index
    %23 = vector.load %arg0[%c256, %c0_9] : memref<784x128xf32, #tpu.memory_space<vmem>>, vector<128x128xf32>
    %cst_10 = arith.constant dense<0.000000e+00> : vector<4x128xf32>
    %24 = tpu.matmul %22, %23, %cst_10 {dimension_numbers = #tpu.dot_dimension_numbers<[1], [0], [0], [1], [0, 0, 1, 1], [], []>} : vector<4x128xf32>, vector<128x128xf32>, vector<4x128xf32> -> vector<4x128xf32>
    %c738 = arith.constant 738 : index
    %c0_11 = arith.constant 0 : index
    %25 = vector.load %arg0[%c738, %c0_11] : memref<784x128xf32, #tpu.memory_space<vmem>>, vector<1x128xf32>
    %26 = vector.broadcast %25 : vector<1x128xf32> to vector<4x128xf32>
    %27 = arith.addf %24, %26 : vector<4x128xf32>
    %28 = math.tanh %27 : vector<4x128xf32>
    %29 = vector.extract_strided_slice %28 {offsets = [0, 0], sizes = [4, 32], strides = [1, 1]} : vector<4x128xf32> to vector<4x32xf32>
    %30 = vector.extract_strided_slice %28 {offsets = [0, 32], sizes = [4, 32], strides = [1, 1]} : vector<4x128xf32> to vector<4x32xf32>
    %31 = vector.extract_strided_slice %29 {offsets = [0, 0], sizes = [2, 32], strides = [1, 1]} : vector<4x32xf32> to vector<2x32xf32>
    %32 = vector.extract_strided_slice %30 {offsets = [2, 0], sizes = [2, 32], strides = [1, 1]} : vector<4x32xf32> to vector<2x32xf32>
    %cst_12 = arith.constant 1.000000e+00 : f32
    %33 = vector.broadcast %cst_12 : f32 to vector<1x32xf32>
    %cst_13 = arith.constant 0.000000e+00 : f32
    %34 = vector.broadcast %cst_13 : f32 to vector<3x32xf32>
    %35 = tpu.concatenate %31, %32, %33, %34 in 0 : vector<2x32xf32>, vector<2x32xf32>, vector<1x32xf32>, vector<3x32xf32> -> vector<8x32xf32>
    %c752 = arith.constant 752 : index
    %c0_14 = arith.constant 0 : index
    %36 = vector.load %arg0[%c752, %c0_14] : memref<784x128xf32, #tpu.memory_space<vmem>>, vector<16x8xf32>
    %cst_15 = arith.constant dense<0.000000e+00> : vector<16x32xf32>
    %37 = tpu.matmul %36, %35, %cst_15 {dimension_numbers = #tpu.dot_dimension_numbers<[1], [0], [0], [1], [0, 0, 1, 1], [], []>} : vector<16x8xf32>, vector<8x32xf32>, vector<16x32xf32> -> vector<16x32xf32>
    %38 = vector.extract_strided_slice %37 {offsets = [0, 0], sizes = [8, 32], strides = [1, 1]} : vector<16x32xf32> to vector<8x32xf32>
    %39 = vector.extract_strided_slice %37 {offsets = [8, 0], sizes = [8, 32], strides = [1, 1]} : vector<16x32xf32> to vector<8x32xf32>
    %40 = math.absf %1 : vector<8x28xf32>
    %cst_16 = arith.constant 4.5399931E-5 : f32
    %41 = vector.broadcast %cst_16 : f32 to vector<8x28xf32>
    %42 = arith.cmpf ogt, %40, %41 : vector<8x28xf32>
    %43 = arith.extui %42 : vector<8x28xi1> to vector<8x28xi32>
    %44 = arith.sitofp %43 : vector<8x28xi32> to vector<8x28xf32>
    %45 = math.absf %1 : vector<8x28xf32>
    %cst_17 = arith.constant 9.99999997E-7 : f32
    %46 = vector.broadcast %cst_17 : f32 to vector<8x28xf32>
    %47 = arith.addf %45, %46 : vector<8x28xf32>
    %48 = math.log %47 : vector<8x28xf32>
    %cst_18 = arith.constant 1.000000e+01 : f32
    %49 = vector.broadcast %cst_18 : f32 to vector<8x28xf32>
    %50 = arith.divf %48, %49 : vector<8x28xf32>
    %51 = arith.mulf %50, %44 : vector<8x28xf32>
    %cst_19 = arith.constant 1.000000e+00 : f32
    %52 = vector.broadcast %cst_19 : f32 to vector<8x28xf32>
    %53 = arith.subf %52, %44 : vector<8x28xf32>
    %54 = arith.subf %51, %53 : vector<8x28xf32>
    %cst_20 = arith.constant 0.000000e+00 : f32
    %55 = vector.broadcast %cst_20 : f32 to vector<8x28xf32>
    %56 = arith.cmpf ogt, %1, %55 : vector<8x28xf32>
    %cst_21 = arith.constant 0.000000e+00 : f32
    %57 = vector.broadcast %cst_21 : f32 to vector<8x28xf32>
    %58 = arith.cmpf olt, %1, %57 : vector<8x28xf32>
    %cst_22 = arith.constant -1.000000e+00 : f32
    %cst_23 = arith.constant 0.000000e+00 : f32
    %59 = vector.broadcast %cst_22 : f32 to vector<8x28xf32>
    %60 = vector.broadcast %cst_23 : f32 to vector<8x28xf32>
    %61 = arith.select %58, %59, %60 : vector<8x28xi1>, vector<8x28xf32>
    %cst_24 = arith.constant 1.000000e+00 : f32
    %62 = vector.broadcast %cst_24 : f32 to vector<8x28xf32>
    %63 = arith.select %56, %62, %61 : vector<8x28xi1>, vector<8x28xf32>
    %64 = arith.mulf %63, %44 : vector<8x28xf32>
    %cst_25 = arith.constant 22026.4648 : f32
    %65 = vector.broadcast %cst_25 : f32 to vector<8x28xf32>
    %66 = arith.mulf %65, %1 : vector<8x28xf32>
    %cst_26 = arith.constant 1.000000e+00 : f32
    %67 = vector.broadcast %cst_26 : f32 to vector<8x28xf32>
    %68 = arith.subf %67, %44 : vector<8x28xf32>
    %69 = arith.mulf %66, %68 : vector<8x28xf32>
    %70 = arith.addf %64, %69 : vector<8x28xf32>
    %71 = tpu.concatenate %54, %70 in 1 : vector<8x28xf32>, vector<8x28xf32> -> vector<8x56xf32>
    %72 = math.absf %2 : vector<8x4xf32>
    %cst_27 = arith.constant 4.5399931E-5 : f32
    %73 = vector.broadcast %cst_27 : f32 to vector<8x4xf32>
    %74 = arith.cmpf ogt, %72, %73 : vector<8x4xf32>
    %75 = arith.extui %74 : vector<8x4xi1> to vector<8x4xi32>
    %76 = arith.sitofp %75 : vector<8x4xi32> to vector<8x4xf32>
    %77 = math.absf %2 : vector<8x4xf32>
    %cst_28 = arith.constant 9.99999997E-7 : f32
    %78 = vector.broadcast %cst_28 : f32 to vector<8x4xf32>
    %79 = arith.addf %77, %78 : vector<8x4xf32>
    %80 = math.log %79 : vector<8x4xf32>
    %cst_29 = arith.constant 1.000000e+01 : f32
    %81 = vector.broadcast %cst_29 : f32 to vector<8x4xf32>
    %82 = arith.divf %80, %81 : vector<8x4xf32>
    %83 = arith.mulf %82, %76 : vector<8x4xf32>
    %cst_30 = arith.constant 1.000000e+00 : f32
    %84 = vector.broadcast %cst_30 : f32 to vector<8x4xf32>
    %85 = arith.subf %84, %76 : vector<8x4xf32>
    %86 = arith.subf %83, %85 : vector<8x4xf32>
    %cst_31 = arith.constant 0.000000e+00 : f32
    %87 = vector.broadcast %cst_31 : f32 to vector<8x4xf32>
    %88 = arith.cmpf ogt, %2, %87 : vector<8x4xf32>
    %cst_32 = arith.constant 0.000000e+00 : f32
    %89 = vector.broadcast %cst_32 : f32 to vector<8x4xf32>
    %90 = arith.cmpf olt, %2, %89 : vector<8x4xf32>
    %cst_33 = arith.constant -1.000000e+00 : f32
    %cst_34 = arith.constant 0.000000e+00 : f32
    %91 = vector.broadcast %cst_33 : f32 to vector<8x4xf32>
    %92 = vector.broadcast %cst_34 : f32 to vector<8x4xf32>
    %93 = arith.select %90, %91, %92 : vector<8x4xi1>, vector<8x4xf32>
    %cst_35 = arith.constant 1.000000e+00 : f32
    %94 = vector.broadcast %cst_35 : f32 to vector<8x4xf32>
    %95 = arith.select %88, %94, %93 : vector<8x4xi1>, vector<8x4xf32>
    %96 = arith.mulf %95, %76 : vector<8x4xf32>
    %cst_36 = arith.constant 22026.4648 : f32
    %97 = vector.broadcast %cst_36 : f32 to vector<8x4xf32>
    %98 = arith.mulf %97, %2 : vector<8x4xf32>
    %cst_37 = arith.constant 1.000000e+00 : f32
    %99 = vector.broadcast %cst_37 : f32 to vector<8x4xf32>
    %100 = arith.subf %99, %76 : vector<8x4xf32>
    %101 = arith.mulf %98, %100 : vector<8x4xf32>
    %102 = arith.addf %96, %101 : vector<8x4xf32>
    %103 = tpu.concatenate %86, %102 in 1 : vector<8x4xf32>, vector<8x4xf32> -> vector<8x8xf32>
    %104 = tpu.concatenate %71, %103 in 1 : vector<8x56xf32>, vector<8x8xf32> -> vector<8x64xf32>
    %c384 = arith.constant 384 : index
    %c0_38 = arith.constant 0 : index
    %105 = vector.load %arg0[%c384, %c0_38] : memref<784x128xf32, #tpu.memory_space<vmem>>, vector<96x128xf32>
    %c739 = arith.constant 739 : index
    %c0_39 = arith.constant 0 : index
    %106 = vector.load %arg0[%c739, %c0_39] : memref<784x128xf32, #tpu.memory_space<vmem>>, vector<1x128xf32>
    %107 = tpu.concatenate %104, %3 in 1 : vector<8x64xf32>, vector<8x32xf32> -> vector<8x96xf32>
    %cst_40 = arith.constant dense<0.000000e+00> : vector<8x128xf32>
    %108 = tpu.matmul %107, %105, %cst_40 {dimension_numbers = #tpu.dot_dimension_numbers<[1], [0], [0], [1], [0, 0, 1, 1], [], []>} : vector<8x96xf32>, vector<96x128xf32>, vector<8x128xf32> -> vector<8x128xf32>
    %109 = vector.broadcast %106 : vector<1x128xf32> to vector<8x128xf32>
    %110 = arith.addf %108, %109 : vector<8x128xf32>
    %111 = vector.extract_strided_slice %110 {offsets = [0, 0], sizes = [8, 96], strides = [1, 1]} : vector<8x128xf32> to vector<8x96xf32>
    %112 = arith.negf %111 : vector<8x96xf32>
    %113 = math.exp %112 : vector<8x96xf32>
    %cst_41 = arith.constant 1.000000e+00 : f32
    %114 = vector.broadcast %cst_41 : f32 to vector<8x96xf32>
    %115 = arith.addf %114, %113 : vector<8x96xf32>
    %116 = arith.divf %114, %115 : vector<8x96xf32>
    %117 = vector.extract_strided_slice %110 {offsets = [0, 96], sizes = [8, 32], strides = [1, 1]} : vector<8x128xf32> to vector<8x32xf32>
    %118 = math.tanh %117 : vector<8x32xf32>
    %119 = vector.extract_strided_slice %116 {offsets = [0, 0], sizes = [8, 32], strides = [1, 1]} : vector<8x96xf32> to vector<8x32xf32>
    %120 = vector.extract_strided_slice %116 {offsets = [0, 32], sizes = [8, 32], strides = [1, 1]} : vector<8x96xf32> to vector<8x32xf32>
    %121 = vector.extract_strided_slice %116 {offsets = [0, 64], sizes = [8, 32], strides = [1, 1]} : vector<8x96xf32> to vector<8x32xf32>
    %122 = arith.mulf %120, %4 : vector<8x32xf32>
    %123 = arith.mulf %119, %118 : vector<8x32xf32>
    %124 = arith.addf %122, %123 : vector<8x32xf32>
    %125 = math.tanh %124 : vector<8x32xf32>
    %126 = arith.mulf %121, %125 : vector<8x32xf32>
    %c576 = arith.constant 576 : index
    %c0_42 = arith.constant 0 : index
    %127 = vector.load %arg0[%c576, %c0_42] : memref<784x128xf32, #tpu.memory_space<vmem>>, vector<32x128xf32>
    %c741 = arith.constant 741 : index
    %c0_43 = arith.constant 0 : index
    %128 = vector.load %arg0[%c741, %c0_43] : memref<784x128xf32, #tpu.memory_space<vmem>>, vector<1x128xf32>
    %c608 = arith.constant 608 : index
    %c0_44 = arith.constant 0 : index
    %129 = vector.load %arg0[%c608, %c0_44] : memref<784x128xf32, #tpu.memory_space<vmem>>, vector<128x128xf32>
    %c742 = arith.constant 742 : index
    %c0_45 = arith.constant 0 : index
    %130 = vector.load %arg0[%c742, %c0_45] : memref<784x128xf32, #tpu.memory_space<vmem>>, vector<1x128xf32>
    %cst_46 = arith.constant dense<0.000000e+00> : vector<8x128xf32>
    %131 = tpu.matmul %126, %127, %cst_46 {dimension_numbers = #tpu.dot_dimension_numbers<[1], [0], [0], [1], [0, 0, 1, 1], [], []>} : vector<8x32xf32>, vector<32x128xf32>, vector<8x128xf32> -> vector<8x128xf32>
    %132 = vector.broadcast %128 : vector<1x128xf32> to vector<8x128xf32>
    %133 = arith.addf %131, %132 : vector<8x128xf32>
    %134 = math.tanh %133 : vector<8x128xf32>
    %cst_47 = arith.constant dense<0.000000e+00> : vector<8x128xf32>
    %135 = tpu.matmul %134, %129, %cst_47 {dimension_numbers = #tpu.dot_dimension_numbers<[1], [0], [0], [1], [0, 0, 1, 1], [], []>} : vector<8x128xf32>, vector<128x128xf32>, vector<8x128xf32> -> vector<8x128xf32>
    %136 = vector.broadcast %130 : vector<1x128xf32> to vector<8x128xf32>
    %137 = arith.addf %135, %136 : vector<8x128xf32>
    %138 = math.tanh %137 : vector<8x128xf32>
    %139 = vector.extract_strided_slice %138 {offsets = [0, 0], sizes = [8, 32], strides = [1, 1]} : vector<8x128xf32> to vector<8x32xf32>
    %140 = math.absf %139 : vector<8x32xf32>
    %cst_48 = arith.constant 4.5399931E-5 : f32
    %141 = vector.broadcast %cst_48 : f32 to vector<8x32xf32>
    %142 = arith.cmpf ogt, %140, %141 : vector<8x32xf32>
    %143 = arith.extui %142 : vector<8x32xi1> to vector<8x32xi32>
    %144 = arith.sitofp %143 : vector<8x32xi32> to vector<8x32xf32>
    %145 = math.absf %139 : vector<8x32xf32>
    %cst_49 = arith.constant 9.99999997E-7 : f32
    %146 = vector.broadcast %cst_49 : f32 to vector<8x32xf32>
    %147 = arith.addf %145, %146 : vector<8x32xf32>
    %148 = math.log %147 : vector<8x32xf32>
    %cst_50 = arith.constant 1.000000e+01 : f32
    %149 = vector.broadcast %cst_50 : f32 to vector<8x32xf32>
    %150 = arith.divf %148, %149 : vector<8x32xf32>
    %151 = arith.mulf %150, %144 : vector<8x32xf32>
    %cst_51 = arith.constant 1.000000e+00 : f32
    %152 = vector.broadcast %cst_51 : f32 to vector<8x32xf32>
    %153 = arith.subf %152, %144 : vector<8x32xf32>
    %154 = arith.subf %151, %153 : vector<8x32xf32>
    %cst_52 = arith.constant 0.000000e+00 : f32
    %155 = vector.broadcast %cst_52 : f32 to vector<8x32xf32>
    %156 = arith.cmpf ogt, %139, %155 : vector<8x32xf32>
    %cst_53 = arith.constant 0.000000e+00 : f32
    %157 = vector.broadcast %cst_53 : f32 to vector<8x32xf32>
    %158 = arith.cmpf olt, %139, %157 : vector<8x32xf32>
    %cst_54 = arith.constant -1.000000e+00 : f32
    %cst_55 = arith.constant 0.000000e+00 : f32
    %159 = vector.broadcast %cst_54 : f32 to vector<8x32xf32>
    %160 = vector.broadcast %cst_55 : f32 to vector<8x32xf32>
    %161 = arith.select %158, %159, %160 : vector<8x32xi1>, vector<8x32xf32>
    %cst_56 = arith.constant 1.000000e+00 : f32
    %162 = vector.broadcast %cst_56 : f32 to vector<8x32xf32>
    %163 = arith.select %156, %162, %161 : vector<8x32xi1>, vector<8x32xf32>
    %164 = arith.mulf %163, %144 : vector<8x32xf32>
    %cst_57 = arith.constant 22026.4648 : f32
    %165 = vector.broadcast %cst_57 : f32 to vector<8x32xf32>
    %166 = arith.mulf %165, %139 : vector<8x32xf32>
    %cst_58 = arith.constant 1.000000e+00 : f32
    %167 = vector.broadcast %cst_58 : f32 to vector<8x32xf32>
    %168 = arith.subf %167, %144 : vector<8x32xf32>
    %169 = arith.mulf %166, %168 : vector<8x32xf32>
    %170 = arith.addf %164, %169 : vector<8x32xf32>
    %171 = tpu.concatenate %154, %170 in 1 : vector<8x32xf32>, vector<8x32xf32> -> vector<8x64xf32>
    %c480 = arith.constant 480 : index
    %c0_59 = arith.constant 0 : index
    %172 = vector.load %arg0[%c480, %c0_59] : memref<784x128xf32, #tpu.memory_space<vmem>>, vector<96x128xf32>
    %c740 = arith.constant 740 : index
    %c0_60 = arith.constant 0 : index
    %173 = vector.load %arg0[%c740, %c0_60] : memref<784x128xf32, #tpu.memory_space<vmem>>, vector<1x128xf32>
    %174 = tpu.concatenate %171, %126 in 1 : vector<8x64xf32>, vector<8x32xf32> -> vector<8x96xf32>
    %cst_61 = arith.constant dense<0.000000e+00> : vector<8x128xf32>
    %175 = tpu.matmul %174, %172, %cst_61 {dimension_numbers = #tpu.dot_dimension_numbers<[1], [0], [0], [1], [0, 0, 1, 1], [], []>} : vector<8x96xf32>, vector<96x128xf32>, vector<8x128xf32> -> vector<8x128xf32>
    %176 = vector.broadcast %173 : vector<1x128xf32> to vector<8x128xf32>
    %177 = arith.addf %175, %176 : vector<8x128xf32>
    %178 = vector.extract_strided_slice %177 {offsets = [0, 0], sizes = [8, 96], strides = [1, 1]} : vector<8x128xf32> to vector<8x96xf32>
    %179 = arith.negf %178 : vector<8x96xf32>
    %180 = math.exp %179 : vector<8x96xf32>
    %cst_62 = arith.constant 1.000000e+00 : f32
    %181 = vector.broadcast %cst_62 : f32 to vector<8x96xf32>
    %182 = arith.addf %181, %180 : vector<8x96xf32>
    %183 = arith.divf %181, %182 : vector<8x96xf32>
    %184 = vector.extract_strided_slice %177 {offsets = [0, 96], sizes = [8, 32], strides = [1, 1]} : vector<8x128xf32> to vector<8x32xf32>
    %185 = math.tanh %184 : vector<8x32xf32>
    %186 = vector.extract_strided_slice %183 {offsets = [0, 0], sizes = [8, 32], strides = [1, 1]} : vector<8x96xf32> to vector<8x32xf32>
    %187 = vector.extract_strided_slice %183 {offsets = [0, 32], sizes = [8, 32], strides = [1, 1]} : vector<8x96xf32> to vector<8x32xf32>
    %188 = vector.extract_strided_slice %183 {offsets = [0, 64], sizes = [8, 32], strides = [1, 1]} : vector<8x96xf32> to vector<8x32xf32>
    %189 = arith.mulf %187, %124 : vector<8x32xf32>
    %190 = arith.mulf %186, %185 : vector<8x32xf32>
    %191 = arith.addf %189, %190 : vector<8x32xf32>
    %192 = math.tanh %191 : vector<8x32xf32>
    %193 = arith.mulf %188, %192 : vector<8x32xf32>
    %cst_63 = arith.constant dense<0.000000e+00> : vector<8x32xf32>
    %194 = tpu.matmul %5, %193, %cst_63 {dimension_numbers = #tpu.dot_dimension_numbers<[1], [0], [0], [1], [0, 0, 1, 1], [], []>} : vector<8x8xf32>, vector<8x32xf32>, vector<8x32xf32> -> vector<8x32xf32>
    %195 = tpu.concatenate %29, %29 in 0 : vector<4x32xf32>, vector<4x32xf32> -> vector<8x32xf32>
    %196 = vector.extract_strided_slice %194 {offsets = [4, 0], sizes = [4, 32], strides = [1, 1]} : vector<8x32xf32> to vector<4x32xf32>
    %197 = vector.extract_strided_slice %194 {offsets = [0, 0], sizes = [4, 32], strides = [1, 1]} : vector<8x32xf32> to vector<4x32xf32>
    %198 = tpu.concatenate %196, %197 in 0 : vector<4x32xf32>, vector<4x32xf32> -> vector<8x32xf32>
    %199 = arith.mulf %195, %198 : vector<8x32xf32>
    %c768 = arith.constant 768 : index
    %c0_64 = arith.constant 0 : index
    %200 = vector.load %arg0[%c768, %c0_64] : memref<784x128xf32, #tpu.memory_space<vmem>>, vector<8x8xf32>
    %cst_65 = arith.constant dense<0.000000e+00> : vector<8x32xf32>
    %201 = tpu.matmul %200, %193, %cst_65 {dimension_numbers = #tpu.dot_dimension_numbers<[1], [0], [0], [1], [0, 0, 1, 1], [], []>} : vector<8x8xf32>, vector<8x32xf32>, vector<8x32xf32> -> vector<8x32xf32>
    %c776 = arith.constant 776 : index
    %c0_66 = arith.constant 0 : index
    %202 = vector.load %arg0[%c776, %c0_66] : memref<784x128xf32, #tpu.memory_space<vmem>>, vector<8x8xf32>
    %cst_67 = arith.constant dense<0.000000e+00> : vector<8x32xf32>
    %203 = tpu.matmul %202, %199, %cst_67 {dimension_numbers = #tpu.dot_dimension_numbers<[1], [0], [0], [1], [0, 0, 1, 1], [], []>} : vector<8x8xf32>, vector<8x32xf32>, vector<8x32xf32> -> vector<8x32xf32>
    %204 = arith.addf %201, %203 : vector<8x32xf32>
    %cst_68 = arith.constant 5.000000e-01 : f32
    %205 = vector.broadcast %cst_68 : f32 to vector<8x32xf32>
    %206 = arith.mulf %204, %205 : vector<8x32xf32>
    %c576_69 = arith.constant 576 : index
    %c0_70 = arith.constant 0 : index
    %207 = vector.load %arg0[%c576_69, %c0_70] : memref<784x128xf32, #tpu.memory_space<vmem>>, vector<32x128xf32>
    %c741_71 = arith.constant 741 : index
    %c0_72 = arith.constant 0 : index
    %208 = vector.load %arg0[%c741_71, %c0_72] : memref<784x128xf32, #tpu.memory_space<vmem>>, vector<1x128xf32>
    %c608_73 = arith.constant 608 : index
    %c0_74 = arith.constant 0 : index
    %209 = vector.load %arg0[%c608_73, %c0_74] : memref<784x128xf32, #tpu.memory_space<vmem>>, vector<128x128xf32>
    %c742_75 = arith.constant 742 : index
    %c0_76 = arith.constant 0 : index
    %210 = vector.load %arg0[%c742_75, %c0_76] : memref<784x128xf32, #tpu.memory_space<vmem>>, vector<1x128xf32>
    %cst_77 = arith.constant dense<0.000000e+00> : vector<8x128xf32>
    %211 = tpu.matmul %206, %207, %cst_77 {dimension_numbers = #tpu.dot_dimension_numbers<[1], [0], [0], [1], [0, 0, 1, 1], [], []>} : vector<8x32xf32>, vector<32x128xf32>, vector<8x128xf32> -> vector<8x128xf32>
    %212 = vector.broadcast %208 : vector<1x128xf32> to vector<8x128xf32>
    %213 = arith.addf %211, %212 : vector<8x128xf32>
    %214 = math.tanh %213 : vector<8x128xf32>
    %cst_78 = arith.constant dense<0.000000e+00> : vector<8x128xf32>
    %215 = tpu.matmul %214, %209, %cst_78 {dimension_numbers = #tpu.dot_dimension_numbers<[1], [0], [0], [1], [0, 0, 1, 1], [], []>} : vector<8x128xf32>, vector<128x128xf32>, vector<8x128xf32> -> vector<8x128xf32>
    %216 = vector.broadcast %210 : vector<1x128xf32> to vector<8x128xf32>
    %217 = arith.addf %215, %216 : vector<8x128xf32>
    %218 = math.tanh %217 : vector<8x128xf32>
    %219 = vector.extract_strided_slice %218 {offsets = [0, 0], sizes = [8, 32], strides = [1, 1]} : vector<8x128xf32> to vector<8x32xf32>
    %220 = vector.extract_strided_slice %219 {offsets = [0, 0], sizes = [4, 32], strides = [1, 1]} : vector<8x32xf32> to vector<4x32xf32>
    %221 = vector.extract_strided_slice %206 {offsets = [0, 0], sizes = [4, 32], strides = [1, 1]} : vector<8x32xf32> to vector<4x32xf32>
    %222 = tpu.concatenate %220, %221 in 0 : vector<4x32xf32>, vector<4x32xf32> -> vector<8x32xf32>
    %223 = vector.extract_strided_slice %191 {offsets = [0, 0], sizes = [4, 32], strides = [1, 1]} : vector<8x32xf32> to vector<4x32xf32>
    %cst_79 = arith.constant 0.000000e+00 : f32
    %224 = vector.broadcast %cst_79 : f32 to vector<4x32xf32>
    %225 = tpu.concatenate %223, %224 in 0 : vector<4x32xf32>, vector<4x32xf32> -> vector<8x32xf32>
    %226 = tpu.concatenate %38, %39, %222, %225 in 1 : vector<8x32xf32>, vector<8x32xf32>, vector<8x32xf32>, vector<8x32xf32> -> vector<8x128xf32>
    %c0_80 = arith.constant 0 : index
    %c0_81 = arith.constant 0 : index
    %227 = vector.load %arg2[%c0_80, %c0_81] : memref<8x128xf32, #tpu.memory_space<vmem>>, vector<8x128xf32>
    tpu.vector_store %arg2[%c0_80, %c0_81], %226 {strides = array<i32>} : memref<8x128xf32, #tpu.memory_space<vmem>>, vector<8x128xf32>,
    return
  }
}

</mosaic_0001>

<llo_original>
// kernel: tpu_custom_call.1
$region0: #{tpu_custom_call.1}
  #allocation0 [shape = 'u32[]', space=smem, size = 0x4, offset = 0x4, fixed_abs, tag = 'smem constant byte address 0x4 - core index']
  #allocation1 [shape = 'u32[144,128]{1,0:T(1,128)}', space=vmem, size = 0x12000, scoped, tag = 'internal scratch']
  %s0 = inlined_call_operand.hbm [shape: f32[784,128], index: 0, kind: input, shape index: {}]
  %s1 = inlined_call_operand.hbm [shape: f32[8,128], index: 1, kind: input, shape index: {}]
  %s2 = inlined_call_operand.hbm [shape: f32[8,128], index: 2, kind: output, shape index: {}]
  %s3 = sld [smem:[#allocation0]]
  $region26: #{tpu_custom_call.1} parent=0
    _
  %s5 = ssub.s32 1, %s3
  %s6 = scalar_select 0, %s5, %s3
  $region1: #{tpu_custom_call.1} parent=0
    #allocation2 [shape = 'u8[401408]{0}', space=vmem, size = 0x62000, scoped, tag = 'input window, operand 0, single buffered']
    #allocation3 [shape = 's32[1]{0}', space=sflag, size = 0x4, scoped, tag = 'scoped memory for tpu_custom_call.1']
    #allocation4 [shape = 's32[1]{0}', space=sflag, size = 0x4, scoped, tag = 'scoped memory for tpu_custom_call.1']
    #allocation5 [shape = 'u8[4096]{0}', space=vmem, size = 0x1000, scoped, tag = 'input window, operand 1, single buffered']
    #allocation6 [shape = 's32[1]{0}', space=sflag, size = 0x4, scoped, tag = 'scoped memory for tpu_custom_call.1']
    #allocation7 [shape = 'u8[4096]{0}', space=vmem, size = 0x1000, scoped, tag = 'output window, operand 0, single buffered']
    %7 = vsyncpa [#allocation3], 0
    %8 = vsyncpa [#allocation6], 0
    %9 = vsyncpa [#allocation4], 0
    // Predicated region
    $region2: #{tpu_custom_call.1} parent=1 // pred_check
      _
    $region3: #{tpu_custom_call.1} parent=1 // pred_check_branch
      %11 = sbr.rel (0) target = $region5
    $region4: #{tpu_custom_call.1} parent=1 // pred_region
      %s13 = ssub.s32 12544, 12544
      %14 = vsyncadd [#allocation3], %s13
      %s15 = sshll.u32 [#allocation2], 4
      %s16 = int_to_ptr.vmem [resolvable:$true] %s15
      %21 = dma.hbm_to_vmem [thread:$0]  %s0, 12544, %s16, [#allocation3], 128, 128, 8
    $region5: #{tpu_custom_call.1} parent=1 // pred_fallthru
      _
    // Predicated region
    $region6: #{tpu_custom_call.1} parent=1 // pred_check
      _
    $region7: #{tpu_custom_call.1} parent=1 // pred_check_branch
      %23 = sbr.rel (0) target = $region9
    $region8: #{tpu_custom_call.1} parent=1 // pred_region
      %s25 = ssub.s32 128, 128
      %26 = vsyncadd [#allocation6], %s25
      %s28 = sshll.u32 [#allocation5], 4
      %s29 = int_to_ptr.vmem [resolvable:$true] %s28
      %31 = dma.hbm_to_vmem [thread:$0]  %s1, 128, %s29, [#allocation6]
    $region9: #{tpu_custom_call.1} parent=1 // pred_fallthru
      _
    // Predicated region
    $region10: #{tpu_custom_call.1} parent=1 // pred_check
      _
    $region11: #{tpu_custom_call.1} parent=1 // pred_check_branch
      %33 = sbr.rel (0) target = $region13
    $region12: #{tpu_custom_call.1} parent=1 // pred_region
      %34 = dma.done [#allocation3], 12544
    $region13: #{tpu_custom_call.1} parent=1 // pred_fallthru
      _
    // Predicated region
    $region14: #{tpu_custom_call.1} parent=1 // pred_check
      _
    $region15: #{tpu_custom_call.1} parent=1 // pred_check_branch
      %36 = sbr.rel (0) target = $region17
    $region16: #{tpu_custom_call.1} parent=1 // pred_region
      %37 = dma.done [#allocation6], 128
    $region17: #{tpu_custom_call.1} parent=1 // pred_fallthru
      _
    %v38 = vld [vmem:[#allocation5] sm:$0xff]
    %v39 = vld [vmem:[#allocation2 + $0x2e8] sm:$0xff]
    %41 = vrot.lane.b32.xlu0 %v38, 96
    %v42 = vpop.permute.xlu0 %41
    %vm44 = vcmask 64512
    %v46 = vsel %vm44, %v39, 0
    %48 = vmatprep.subr.mxu0 0.0
    %49 = vmatpush1.msra.mxu0 %v42
    %50 = vmatprep.subr.mxu0 0.0
    %51 = vmatpush1.msra.mxu0 0.0
    %52 = vmatprep.subr.mxu0 0.0
    %53 = vmatpush1.msra.mxu0 0.0
    %54 = vmatprep.subr.mxu0 0.0
    %55 = vmatpush1.msra.mxu0 0.0
    %56 = vmatprep.subr.mxu0 0.0
    %57 = vmatpush1.msra.mxu0 0.0
    %58 = vmatprep.subr.mxu0 0.0
    %59 = vmatpush1.msra.mxu0 0.0
    %60 = vmatprep.subr.mxu0 0.0
    %61 = vmatpush1.msra.mxu0 0.0
    %62 = vmatprep.subr.mxu0 0.0
    %63 = vmatpush1.msra.mxu0 0.0
    %64 = vmatprep.subr.mxu0 0.0
    %65 = vmatpush1.msra.mxu0 0.0
    %66 = vmatprep.subr.mxu0 0.0
    %67 = vmatpush1.msra.mxu0 0.0
    %68 = vmatprep.subr.mxu0 0.0
    %69 = vmatpush1.msra.mxu0 0.0
    %70 = vmatprep.subr.mxu0 0.0
    %71 = vmatpush1.msra.mxu0 0.0
    %72 = vmatprep.subr.mxu0 0.0
    %73 = vmatpush1.msra.mxu0 0.0
    %74 = vmatprep.subr.mxu0 0.0
    %75 = vmatpush1.msra.mxu0 0.0
    %76 = vmatprep.subr.mxu0 0.0
    %77 = vmatpush1.msra.mxu0 0.0
    %78 = vmatprep.subr.mxu0 0.0
    %79 = vmatpush1.msra.mxu0 0.0
    %80 = vmatprep.subr.mxu0 0.0
    %81 = vmatpush1.msra.mxu0 0.0
    %82 = vmatprep.subr.mxu0 0.0
    %83 = vmatpush1.msra.mxu0 0.0
    %84 = vmatprep.subr.mxu0 0.0
    %85 = vmatpush1.msra.mxu0 0.0
    %86 = vmatprep.subr.mxu0 0.0
    %87 = vmatpush1.msra.mxu0 0.0
    %88 = vmatprep.subr.mxu0 0.0
    %89 = vmatpush1.msra.mxu0 0.0
    %90 = vmatprep.subr.mxu0 0.0
    %91 = vmatpush1.msra.mxu0 0.0
    %92 = vmatprep.subr.mxu0 0.0
    %93 = vmatpush1.msra.mxu0 0.0
    %94 = vmatprep.subr.mxu0 0.0
    %95 = vmatpush1.msra.mxu0 0.0
    %96 = vmatprep.subr.mxu0 0.0
    %97 = vmatpush1.msra.mxu0 0.0
    %98 = vmatprep.subr.mxu0 0.0
    %99 = vmatpush1.msra.mxu0 0.0
    %100 = vmatprep.subr.mxu0 0.0
    %101 = vmatpush1.msra.mxu0 0.0
    %102 = vmatprep.subr.mxu0 0.0
    %103 = vmatpush1.msra.mxu0 0.0
    %104 = vmatprep.subr.mxu0 0.0
    %105 = vmatpush1.msra.mxu0 0.0
    %106 = vmatprep.subr.mxu0 0.0
    %107 = vmatpush1.msra.mxu0 0.0
    %108 = vmatprep.subr.mxu0 0.0
    %109 = vmatpush1.msra.mxu0 0.0
    %110 = vmatprep.subr.mxu0 0.0
    %111 = vmatpush1.msra.mxu0 0.0
    %112 = vmatprep.mubr.f32.mxu0 0.0
    %113 = vmatmul.mubr.f32.gmra.mrb[0].mxu0 %v46
    %v114 = vpop.f32.mrb[0].mxu0
    %v115 = vadd.f32 0.0, %v114
    %v116 = vpop.f32.mrb[0].mxu0
    %117 = vdwg.mxu0
    %v119 = vrot.slane %v115, 4
    %120 = vrot.lane.b32.xlu0 %v119, 32
    %v121 = vpop.permute.xlu0 %120
    %vm123 = vcmask 261120
    %v124 = vsel %vm123, %v115, %v121
    %126 = vrot.lane.b32.xlu0 %v124, 64
    %v127 = vpop.permute.xlu0 %126
    %vm129 = vcmask 523264
    %v130 = vsel %vm129, %v124, %v127
    %v131 = vld [vmem:[#allocation2] sm:$0xff]
    %v132 = vld [vmem:[#allocation2 + $0x8] sm:$0xff]
    %v133 = vld [vmem:[#allocation2 + $0x10] sm:$0xff]
    %v134 = vld [vmem:[#allocation2 + $0x18] sm:$0xff]
    %v135 = vld [vmem:[#allocation2 + $0x20] sm:$0xff]
    %v136 = vld [vmem:[#allocation2 + $0x28] sm:$0xff]
    %v137 = vld [vmem:[#allocation2 + $0x30] sm:$0xff]
    %v138 = vld [vmem:[#allocation2 + $0x38] sm:$0xff]
    %v139 = vld [vmem:[#allocation2 + $0x40] sm:$0xff]
    %v140 = vld [vmem:[#allocation2 + $0x48] sm:$0xff]
    %v141 = vld [vmem:[#allocation2 + $0x50] sm:$0xff]
    %v142 = vld [vmem:[#allocation2 + $0x58] sm:$0xff]
    %v143 = vld [vmem:[#allocation2 + $0x60] sm:$0xff]
    %v144 = vld [vmem:[#allocation2 + $0x68] sm:$0xff]
    %v145 = vld [vmem:[#allocation2 + $0x70] sm:$0xff]
    %v146 = vld [vmem:[#allocation2 + $0x78] sm:$0xff]
    %v147 = vld [vmem:[#allocation2 + $0x2e0] sm:$0x1]
    %v148 = vlaneseq
    %v149 = vshrl.u32 %v148, 7
    %v150 = vsub.s32 0, %v149
    %v151 = vrot.slane %v147, %v150
    %152 = vmatprep.subr.mxu0 0.0
    %153 = vmatpush1.msra.mxu0 %v131
    %154 = vmatprep.subr.mxu0 0.0
    %155 = vmatpush1.msra.mxu0 %v132
    %156 = vmatprep.subr.mxu0 0.0
    %157 = vmatpush1.msra.mxu0 %v133
    %158 = vmatprep.subr.mxu0 0.0
    %159 = vmatpush1.msra.mxu0 %v134
    %160 = vmatprep.subr.mxu0 0.0
    %161 = vmatpush1.msra.mxu0 %v135
    %162 = vmatprep.subr.mxu0 0.0
    %163 = vmatpush1.msra.mxu0 %v136
    %164 = vmatprep.subr.mxu0 0.0
    %165 = vmatpush1.msra.mxu0 %v137
    %166 = vmatprep.subr.mxu0 0.0
    %167 = vmatpush1.msra.mxu0 %v138
    %168 = vmatprep.subr.mxu0 0.0
    %169 = vmatpush1.msra.mxu0 %v139
    %170 = vmatprep.subr.mxu0 0.0
    %171 = vmatpush1.msra.mxu0 %v140
    %172 = vmatprep.subr.mxu0 0.0
    %173 = vmatpush1.msra.mxu0 %v141
    %174 = vmatprep.subr.mxu0 0.0
    %175 = vmatpush1.msra.mxu0 %v142
    %176 = vmatprep.subr.mxu0 0.0
    %177 = vmatpush1.msra.mxu0 %v143
    %178 = vmatprep.subr.mxu0 0.0
    %179 = vmatpush1.msra.mxu0 %v144
    %180 = vmatprep.subr.mxu0 0.0
    %181 = vmatpush1.msra.mxu0 %v145
    %182 = vmatprep.subr.mxu0 0.0
    %183 = vmatpush1.msra.mxu0 %v146
    %184 = vmatprep.subr.mxu0 0.0
    %185 = vmatpush1.msra.mxu0 0.0
    %186 = vmatprep.subr.mxu0 0.0
    %187 = vmatpush1.msra.mxu0 0.0
    %188 = vmatprep.subr.mxu0 0.0
    %189 = vmatpush1.msra.mxu0 0.0
    %190 = vmatprep.subr.mxu0 0.0
    %191 = vmatpush1.msra.mxu0 0.0
    %192 = vmatprep.subr.mxu0 0.0
    %193 = vmatpush1.msra.mxu0 0.0
    %194 = vmatprep.subr.mxu0 0.0
    %195 = vmatpush1.msra.mxu0 0.0
    %196 = vmatprep.subr.mxu0 0.0
    %197 = vmatpush1.msra.mxu0 0.0
    %198 = vmatprep.subr.mxu0 0.0
    %199 = vmatpush1.msra.mxu0 0.0
    %200 = vmatprep.subr.mxu0 0.0
    %201 = vmatpush1.msra.mxu0 0.0
    %202 = vmatprep.subr.mxu0 0.0
    %203 = vmatpush1.msra.mxu0 0.0
    %204 = vmatprep.subr.mxu0 0.0
    %205 = vmatpush1.msra.mxu0 0.0
    %206 = vmatprep.subr.mxu0 0.0
    %207 = vmatpush1.msra.mxu0 0.0
    %208 = vmatprep.subr.mxu0 0.0
    %209 = vmatpush1.msra.mxu0 0.0
    %210 = vmatprep.subr.mxu0 0.0
    %211 = vmatpush1.msra.mxu0 0.0
    %212 = vmatprep.subr.mxu0 0.0
    %213 = vmatpush1.msra.mxu0 0.0
    %214 = vmatprep.subr.mxu0 0.0
    %215 = vmatpush1.msra.mxu0 0.0
    %216 = vmatprep.mubr.f32.mxu0 0.0
    %217 = vmatmul.mubr.f32.gmra.mrb[0].mxu0 %v130
    %v218 = vpop.f32.mrb[0].mxu0
    %v219 = vadd.f32 %v151, %v218
    %v220 = vpop.f32.mrb[0].mxu0
    %221 = vdwg.mxu0
    %v222 = vtanh.pop %v219
    %v223 = vld [vmem:[#allocation2 + $0x80] sm:$0xff]
    %v224 = vld [vmem:[#allocation2 + $0x88] sm:$0xff]
    %v225 = vld [vmem:[#allocation2 + $0x90] sm:$0xff]
    %v226 = vld [vmem:[#allocation2 + $0x98] sm:$0xff]
    %v227 = vld [vmem:[#allocation2 + $0xa0] sm:$0xff]
    %v228 = vld [vmem:[#allocation2 + $0xa8] sm:$0xff]
    %v229 = vld [vmem:[#allocation2 + $0xb0] sm:$0xff]
    %v230 = vld [vmem:[#allocation2 + $0xb8] sm:$0xff]
    %v231 = vld [vmem:[#allocation2 + $0xc0] sm:$0xff]
    %v232 = vld [vmem:[#allocation2 + $0xc8] sm:$0xff]
    %v233 = vld [vmem:[#allocation2 + $0xd0] sm:$0xff]
    %v234 = vld [vmem:[#allocation2 + $0xd8] sm:$0xff]
    %v235 = vld [vmem:[#allocation2 + $0xe0] sm:$0xff]
    %v236 = vld [vmem:[#allocation2 + $0xe8] sm:$0xff]
    %v237 = vld [vmem:[#allocation2 + $0xf0] sm:$0xff]
    %v238 = vld [vmem:[#allocation2 + $0xf8] sm:$0xff]
    %v239 = vld [vmem:[#allocation2 + $0x2e1] sm:$0x1]
    %v240 = vlaneseq
    %v241 = vshrl.u32 %v240, 7
    %v242 = vsub.s32 0, %v241
    %v243 = vrot.slane %v239, %v242
    %244 = vmatprep.subr.mxu0 0.0
    %245 = vmatpush1.msra.mxu0 %v223
    %246 = vmatprep.subr.mxu0 0.0
    %247 = vmatpush1.msra.mxu0 %v224
    %248 = vmatprep.subr.mxu0 0.0
    %249 = vmatpush1.msra.mxu0 %v225
    %250 = vmatprep.subr.mxu0 0.0
    %251 = vmatpush1.msra.mxu0 %v226
    %252 = vmatprep.subr.mxu0 0.0
    %253 = vmatpush1.msra.mxu0 %v227
    %254 = vmatprep.subr.mxu0 0.0
    %255 = vmatpush1.msra.mxu0 %v228
    %256 = vmatprep.subr.mxu0 0.0
    %257 = vmatpush1.msra.mxu0 %v229
    %258 = vmatprep.subr.mxu0 0.0
    %259 = vmatpush1.msra.mxu0 %v230
    %260 = vmatprep.subr.mxu0 0.0
    %261 = vmatpush1.msra.mxu0 %v231
    %262 = vmatprep.subr.mxu0 0.0
    %263 = vmatpush1.msra.mxu0 %v232
    %264 = vmatprep.subr.mxu0 0.0
    %265 = vmatpush1.msra.mxu0 %v233
    %266 = vmatprep.subr.mxu0 0.0
    %267 = vmatpush1.msra.mxu0 %v234
    %268 = vmatprep.subr.mxu0 0.0
    %269 = vmatpush1.msra.mxu0 %v235
    %270 = vmatprep.subr.mxu0 0.0
    %271 = vmatpush1.msra.mxu0 %v236
    %272 = vmatprep.subr.mxu0 0.0
    %273 = vmatpush1.msra.mxu0 %v237
    %274 = vmatprep.subr.mxu0 0.0
    %275 = vmatpush1.msra.mxu0 %v238
    %276 = vmatprep.subr.mxu0 0.0
    %277 = vmatpush1.msra.mxu0 0.0
    %278 = vmatprep.subr.mxu0 0.0
    %279 = vmatpush1.msra.mxu0 0.0
    %280 = vmatprep.subr.mxu0 0.0
    %281 = vmatpush1.msra.mxu0 0.0
    %282 = vmatprep.subr.mxu0 0.0
    %283 = vmatpush1.msra.mxu0 0.0
    %284 = vmatprep.subr.mxu0 0.0
    %285 = vmatpush1.msra.mxu0 0.0
    %286 = vmatprep.subr.mxu0 0.0
    %287 = vmatpush1.msra.mxu0 0.0
    %288 = vmatprep.subr.mxu0 0.0
    %289 = vmatpush1.msra.mxu0 0.0
    %290 = vmatprep.subr.mxu0 0.0
    %291 = vmatpush1.msra.mxu0 0.0
    %292 = vmatprep.subr.mxu0 0.0
    %293 = vmatpush1.msra.mxu0 0.0
    %294 = vmatprep.subr.mxu0 0.0
    %295 = vmatpush1.msra.mxu0 0.0
    %296 = vmatprep.subr.mxu0 0.0
    %297 = vmatpush1.msra.mxu0 0.0
    %298 = vmatprep.subr.mxu0 0.0
    %299 = vmatpush1.msra.mxu0 0.0
    %300 = vmatprep.subr.mxu0 0.0
    %301 = vmatpush1.msra.mxu0 0.0
    %302 = vmatprep.subr.mxu0 0.0
    %303 = vmatpush1.msra.mxu0 0.0
    %304 = vmatprep.subr.mxu0 0.0
    %305 = vmatpush1.msra.mxu0 0.0
    %306 = vmatprep.subr.mxu0 0.0
    %307 = vmatpush1.msra.mxu0 0.0
    %308 = vmatprep.mubr.f32.mxu0 0.0
    %309 = vmatmul.mubr.f32.gmra.mrb[0].mxu0 %v222
    %v310 = vpop.f32.mrb[0].mxu0
    %v311 = vadd.f32 %v243, %v310
    %v312 = vpop.f32.mrb[0].mxu0
    %313 = vdwg.mxu0
    %v314 = vtanh.pop %v311
    %v315 = vld [vmem:[#allocation2 + $0x100] sm:$0xff]
    %v316 = vld [vmem:[#allocation2 + $0x108] sm:$0xff]
    %v317 = vld [vmem:[#allocation2 + $0x110] sm:$0xff]
    %v318 = vld [vmem:[#allocation2 + $0x118] sm:$0xff]
    %v319 = vld [vmem:[#allocation2 + $0x120] sm:$0xff]
    %v320 = vld [vmem:[#allocation2 + $0x128] sm:$0xff]
    %v321 = vld [vmem:[#allocation2 + $0x130] sm:$0xff]
    %v322 = vld [vmem:[#allocation2 + $0x138] sm:$0xff]
    %v323 = vld [vmem:[#allocation2 + $0x140] sm:$0xff]
    %v324 = vld [vmem:[#allocation2 + $0x148] sm:$0xff]
    %v325 = vld [vmem:[#allocation2 + $0x150] sm:$0xff]
    %v326 = vld [vmem:[#allocation2 + $0x158] sm:$0xff]
    %v327 = vld [vmem:[#allocation2 + $0x160] sm:$0xff]
    %v328 = vld [vmem:[#allocation2 + $0x168] sm:$0xff]
    %v329 = vld [vmem:[#allocation2 + $0x170] sm:$0xff]
    %v330 = vld [vmem:[#allocation2 + $0x178] sm:$0xff]
    %v331 = vld [vmem:[#allocation2 + $0x2e2] sm:$0x1]
    %v332 = vlaneseq
    %v333 = vshrl.u32 %v332, 7
    %v334 = vsub.s32 0, %v333
    %v335 = vrot.slane %v331, %v334
    %336 = vmatprep.subr.mxu0 0.0
    %337 = vmatpush1.msra.mxu0 %v315
    %338 = vmatprep.subr.mxu0 0.0
    %339 = vmatpush1.msra.mxu0 %v316
    %340 = vmatprep.subr.mxu0 0.0
    %341 = vmatpush1.msra.mxu0 %v317
    %342 = vmatprep.subr.mxu0 0.0
    %343 = vmatpush1.msra.mxu0 %v318
    %344 = vmatprep.subr.mxu0 0.0
    %345 = vmatpush1.msra.mxu0 %v319
    %346 = vmatprep.subr.mxu0 0.0
    %347 = vmatpush1.msra.mxu0 %v320
    %348 = vmatprep.subr.mxu0 0.0
    %349 = vmatpush1.msra.mxu0 %v321
    %350 = vmatprep.subr.mxu0 0.0
    %351 = vmatpush1.msra.mxu0 %v322
    %352 = vmatprep.subr.mxu0 0.0
    %353 = vmatpush1.msra.mxu0 %v323
    %354 = vmatprep.subr.mxu0 0.0
    %355 = vmatpush1.msra.mxu0 %v324
    %356 = vmatprep.subr.mxu0 0.0
    %357 = vmatpush1.msra.mxu0 %v325
    %358 = vmatprep.subr.mxu0 0.0
    %359 = vmatpush1.msra.mxu0 %v326
    %360 = vmatprep.subr.mxu0 0.0
    %361 = vmatpush1.msra.mxu0 %v327
    %362 = vmatprep.subr.mxu0 0.0
    %363 = vmatpush1.msra.mxu0 %v328
    %364 = vmatprep.subr.mxu0 0.0
    %365 = vmatpush1.msra.mxu0 %v329
    %366 = vmatprep.subr.mxu0 0.0
    %367 = vmatpush1.msra.mxu0 %v330
    %368 = vmatprep.subr.mxu0 0.0
    %369 = vmatpush1.msra.mxu0 0.0
    %370 = vmatprep.subr.mxu0 0.0
    %371 = vmatpush1.msra.mxu0 0.0
    %372 = vmatprep.subr.mxu0 0.0
    %373 = vmatpush1.msra.mxu0 0.0
    %374 = vmatprep.subr.mxu0 0.0
    %375 = vmatpush1.msra.mxu0 0.0
    %376 = vmatprep.subr.mxu0 0.0
    %377 = vmatpush1.msra.mxu0 0.0
    %378 = vmatprep.subr.mxu0 0.0
    %379 = vmatpush1.msra.mxu0 0.0
    %380 = vmatprep.subr.mxu0 0.0
    %381 = vmatpush1.msra.mxu0 0.0
    %382 = vmatprep.subr.mxu0 0.0
    %383 = vmatpush1.msra.mxu0 0.0
    %384 = vmatprep.subr.mxu0 0.0
    %385 = vmatpush1.msra.mxu0 0.0
    %386 = vmatprep.subr.mxu0 0.0
    %387 = vmatpush1.msra.mxu0 0.0
    %388 = vmatprep.subr.mxu0 0.0
    %389 = vmatpush1.msra.mxu0 0.0
    %390 = vmatprep.subr.mxu0 0.0
    %391 = vmatpush1.msra.mxu0 0.0
    %392 = vmatprep.subr.mxu0 0.0
    %393 = vmatpush1.msra.mxu0 0.0
    %394 = vmatprep.subr.mxu0 0.0
    %395 = vmatpush1.msra.mxu0 0.0
    %396 = vmatprep.subr.mxu0 0.0
    %397 = vmatpush1.msra.mxu0 0.0
    %398 = vmatprep.subr.mxu0 0.0
    %399 = vmatpush1.msra.mxu0 0.0
    %400 = vmatprep.mubr.f32.mxu0 0.0
    %401 = vmatmul.mubr.f32.gmra.mrb[0].mxu0 %v314
    %v402 = vpop.f32.mrb[0].mxu0
    %v403 = vadd.f32 %v335, %v402
    %v404 = vpop.f32.mrb[0].mxu0
    %405 = vdwg.mxu0
    %v406 = vtanh.pop %v403
    %408 = vrot.lane.b32.xlu0 %v406, 96
    %v409 = vpop.permute.xlu0 %408
    %vm411 = vcmask 1041408
    %v412 = vsel %vm411, %v406, %v409
    %vm413 = vcmask 1043456
    %v414 = vsel %vm413, %v412, 1.0
    %vm415 = vcmask 1044480
    %v416 = vsel %vm415, %v414, 0.0
    %v417 = vld [vmem:[#allocation2 + $0x2f0] sm:$0xff]
    %v418 = vld [vmem:[#allocation2 + $0x2f8] sm:$0xff]
    %v420 = vsel %vm44, %v417, 0
    %v423 = vsel %vm44, %v418, 0
    %425 = vmatprep.subr.mxu0 0.0
    %426 = vmatpush1.msra.mxu0 %v416
    %427 = vmatprep.subr.mxu0 0.0
    %428 = vmatpush1.msra.mxu0 0.0
    %429 = vmatprep.subr.mxu0 0.0
    %430 = vmatpush1.msra.mxu0 0.0
    %431 = vmatprep.subr.mxu0 0.0
    %432 = vmatpush1.msra.mxu0 0.0
    %433 = vmatprep.subr.mxu0 0.0
    %434 = vmatpush1.msra.mxu0 0.0
    %435 = vmatprep.subr.mxu0 0.0
    %436 = vmatpush1.msra.mxu0 0.0
    %437 = vmatprep.subr.mxu0 0.0
    %438 = vmatpush1.msra.mxu0 0.0
    %439 = vmatprep.subr.mxu0 0.0
    %440 = vmatpush1.msra.mxu0 0.0
    %441 = vmatprep.subr.mxu0 0.0
    %442 = vmatpush1.msra.mxu0 0.0
    %443 = vmatprep.subr.mxu0 0.0
    %444 = vmatpush1.msra.mxu0 0.0
    %445 = vmatprep.subr.mxu0 0.0
    %446 = vmatpush1.msra.mxu0 0.0
    %447 = vmatprep.subr.mxu0 0.0
    %448 = vmatpush1.msra.mxu0 0.0
    %449 = vmatprep.subr.mxu0 0.0
    %450 = vmatpush1.msra.mxu0 0.0
    %451 = vmatprep.subr.mxu0 0.0
    %452 = vmatpush1.msra.mxu0 0.0
    %453 = vmatprep.subr.mxu0 0.0
    %454 = vmatpush1.msra.mxu0 0.0
    %455 = vmatprep.subr.mxu0 0.0
    %456 = vmatpush1.msra.mxu0 0.0
    %457 = vmatprep.subr.mxu0 0.0
    %458 = vmatpush1.msra.mxu0 0.0
    %459 = vmatprep.subr.mxu0 0.0
    %460 = vmatpush1.msra.mxu0 0.0
    %461 = vmatprep.subr.mxu0 0.0
    %462 = vmatpush1.msra.mxu0 0.0
    %463 = vmatprep.subr.mxu0 0.0
    %464 = vmatpush1.msra.mxu0 0.0
    %465 = vmatprep.subr.mxu0 0.0
    %466 = vmatpush1.msra.mxu0 0.0
    %467 = vmatprep.subr.mxu0 0.0
    %468 = vmatpush1.msra.mxu0 0.0
    %469 = vmatprep.subr.mxu0 0.0
    %470 = vmatpush1.msra.mxu0 0.0
    %471 = vmatprep.subr.mxu0 0.0
    %472 = vmatpush1.msra.mxu0 0.0
    %473 = vmatprep.subr.mxu0 0.0
    %474 = vmatpush1.msra.mxu0 0.0
    %475 = vmatprep.subr.mxu0 0.0
    %476 = vmatpush1.msra.mxu0 0.0
    %477 = vmatprep.subr.mxu0 0.0
    %478 = vmatpush1.msra.mxu0 0.0
    %479 = vmatprep.subr.mxu0 0.0
    %480 = vmatpush1.msra.mxu0 0.0
    %481 = vmatprep.subr.mxu0 0.0
    %482 = vmatpush1.msra.mxu0 0.0
    %483 = vmatprep.subr.mxu0 0.0
    %484 = vmatpush1.msra.mxu0 0.0
    %485 = vmatprep.subr.mxu0 0.0
    %486 = vmatpush1.msra.mxu0 0.0
    %487 = vmatprep.subr.mxu0 0.0
    %488 = vmatpush1.msra.mxu0 0.0
    %489 = vmatprep.mubr.f32.mxu0 0.0
    %490 = vmatmul.mubr.f32.gmra.mrb[0].mxu0 %v420
    %v491 = vpop.f32.mrb[0].mxu0
    %v492 = vadd.f32 0.0, %v491
    %v493 = vpop.f32.mrb[0].mxu0
    %494 = vmatprep.mubr.f32.mxu0 0.0
    %495 = vmatmul.mubr.f32.gmra.mrb[0].mxu0 %v423
    %v496 = vpop.f32.mrb[0].mxu0
    %v497 = vadd.f32 0.0, %v496
    %v498 = vpop.f32.mrb[0].mxu0
    %499 = vdwg.mxu0
    %v500 = vand.u32 2147483647, %v38
    %vm501 = vcmp.gt.f32.partialorder %v500, 4.539993e-05
    %v502 = vsel %vm501, 1, 0
    %v503 = vcvt.s32.f32 %v502
    %v504 = vadd.f32 %v500, 1e-06
    %v505 = vlog2.pop %v504
    %v506 = vmul.f32 %v505, 0.6931472
    %v507 = vrcp.pop 10.0
    %v508 = vmul.f32 %v506, %v507
    %v509 = vmul.f32 %v508, %v503
    %v510 = vsub.f32 1.0, %v503
    %v511 = vsub.f32 %v509, %v510
    %vm512 = vcmp.gt.f32.partialorder %v38, 0.0
    %vm513 = vcmp.lt.f32.partialorder %v38, 0.0
    %v514 = vsel %vm513, -1.0, 0.0
    %v515 = vsel %vm512, 1.0, %v514
    %v516 = vmul.f32 %v515, %v503
    %v517 = vmul.f32 %v38, 22026.465
    %v518 = vmul.f32 %v517, %v510
    %v519 = vadd.f32 %v516, %v518
    %521 = vrot.lane.b32.xlu0 %v519, 28
    %v522 = vpop.permute.xlu0 %521
    %vm524 = vcmask 228352
    %v525 = vsel %vm524, %v511, %v522
    %527 = vrot.lane.b32.xlu0 %v511, 100
    %v528 = vpop.permute.xlu0 %527
    %530 = vrot.lane.b32.xlu0 %v519, 104
    %v531 = vpop.permute.xlu0 %530
    %vm533 = vcmask 31744
    %v534 = vsel %vm533, %v528, %v531
    %536 = vrot.lane.b32.xlu0 %v534, 56
    %v537 = vpop.permute.xlu0 %536
    %vm539 = vcmask 457728
    %v540 = vsel %vm539, %v525, %v537
    %v541 = vld [vmem:[#allocation2 + $0x180] sm:$0xff]
    %v542 = vld [vmem:[#allocation2 + $0x188] sm:$0xff]
    %v543 = vld [vmem:[#allocation2 + $0x190] sm:$0xff]
    %v544 = vld [vmem:[#allocation2 + $0x198] sm:$0xff]
    %v545 = vld [vmem:[#allocation2 + $0x1a0] sm:$0xff]
    %v546 = vld [vmem:[#allocation2 + $0x1a8] sm:$0xff]
    %v547 = vld [vmem:[#allocation2 + $0x1b0] sm:$0xff]
    %v548 = vld [vmem:[#allocation2 + $0x1b8] sm:$0xff]
    %v549 = vld [vmem:[#allocation2 + $0x1c0] sm:$0xff]
    %v550 = vld [vmem:[#allocation2 + $0x1c8] sm:$0xff]
    %v551 = vld [vmem:[#allocation2 + $0x1d0] sm:$0xff]
    %v552 = vld [vmem:[#allocation2 + $0x1d8] sm:$0xff]
    %v553 = vld [vmem:[#allocation2 + $0x2e3] sm:$0x1]
    %554 = vrot.lane.b32.xlu0 %v38, 32
    %v555 = vpop.permute.xlu0 %554
    %v557 = vsel %vm129, %v540, %v555
    %v558 = vlaneseq
    %v559 = vshrl.u32 %v558, 7
    %v560 = vsub.s32 0, %v559
    %v561 = vrot.slane %v553, %v560
    %vm562 = vcmask 785408
    %v564 = vsel %vm562, %v557, 0
    %566 = vmatprep.subr.mxu0 0.0
    %567 = vmatpush1.msra.mxu0 %v541
    %568 = vmatprep.subr.mxu0 0.0
    %569 = vmatpush1.msra.mxu0 %v542
    %570 = vmatprep.subr.mxu0 0.0
    %571 = vmatpush1.msra.mxu0 %v543
    %572 = vmatprep.subr.mxu0 0.0
    %573 = vmatpush1.msra.mxu0 %v544
    %574 = vmatprep.subr.mxu0 0.0
    %575 = vmatpush1.msra.mxu0 %v545
    %576 = vmatprep.subr.mxu0 0.0
    %577 = vmatpush1.msra.mxu0 %v546
    %578 = vmatprep.subr.mxu0 0.0
    %579 = vmatpush1.msra.mxu0 %v547
    %580 = vmatprep.subr.mxu0 0.0
    %581 = vmatpush1.msra.mxu0 %v548
    %582 = vmatprep.subr.mxu0 0.0
    %583 = vmatpush1.msra.mxu0 %v549
    %584 = vmatprep.subr.mxu0 0.0
    %585 = vmatpush1.msra.mxu0 %v550
    %586 = vmatprep.subr.mxu0 0.0
    %587 = vmatpush1.msra.mxu0 %v551
    %588 = vmatprep.subr.mxu0 0.0
    %589 = vmatpush1.msra.mxu0 %v552
    %590 = vmatprep.subr.mxu0 0.0
    %591 = vmatpush1.msra.mxu0 0.0
    %592 = vmatprep.subr.mxu0 0.0
    %593 = vmatpush1.msra.mxu0 0.0
    %594 = vmatprep.subr.mxu0 0.0
    %595 = vmatpush1.msra.mxu0 0.0
    %596 = vmatprep.subr.mxu0 0.0
    %597 = vmatpush1.msra.mxu0 0.0
    %598 = vmatprep.subr.mxu0 0.0
    %599 = vmatpush1.msra.mxu0 0.0
    %600 = vmatprep.subr.mxu0 0.0
    %601 = vmatpush1.msra.mxu0 0.0
    %602 = vmatprep.subr.mxu0 0.0
    %603 = vmatpush1.msra.mxu0 0.0
    %604 = vmatprep.subr.mxu0 0.0
    %605 = vmatpush1.msra.mxu0 0.0
    %606 = vmatprep.subr.mxu0 0.0
    %607 = vmatpush1.msra.mxu0 0.0
    %608 = vmatprep.subr.mxu0 0.0
    %609 = vmatpush1.msra.mxu0 0.0
    %610 = vmatprep.subr.mxu0 0.0
    %611 = vmatpush1.msra.mxu0 0.0
    %612 = vmatprep.subr.mxu0 0.0
    %613 = vmatpush1.msra.mxu0 0.0
    %614 = vmatprep.subr.mxu0 0.0
    %615 = vmatpush1.msra.mxu0 0.0
    %616 = vmatprep.subr.mxu0 0.0
    %617 = vmatpush1.msra.mxu0 0.0
    %618 = vmatprep.subr.mxu0 0.0
    %619 = vmatpush1.msra.mxu0 0.0
    %620 = vmatprep.subr.mxu0 0.0
    %621 = vmatpush1.msra.mxu0 0.0
    %622 = vmatprep.subr.mxu0 0.0
    %623 = vmatpush1.msra.mxu0 0.0
    %624 = vmatprep.subr.mxu0 0.0
    %625 = vmatpush1.msra.mxu0 0.0
    %626 = vmatprep.subr.mxu0 0.0
    %627 = vmatpush1.msra.mxu0 0.0
    %628 = vmatprep.subr.mxu0 0.0
    %629 = vmatpush1.msra.mxu0 0.0
    %630 = vmatprep.mubr.f32.mxu0 0.0
    %631 = vmatmul.mubr.f32.gmra.mrb[0].mxu0 %v564
    %v632 = vpop.f32.mrb[0].mxu0
    %v633 = vadd.f32 %v561, %v632
    %v634 = vpop.f32.mrb[0].mxu0
    %635 = vdwg.mxu0
    %v636 = vxor.u32 %v633, 2147483648
    %v637 = vmul.f32 %v636, 1.442695
    %v638 = vpow.pop %v637
    %v639 = vadd.f32 %v638, 1.0
    %v640 = vrcp.pop %v639
    %v641 = vmul.f32 1.0, %v640
    %v642 = vtanh.pop %v633
    %v643 = vmul.f32 %v641, %v42
    %645 = vrot.lane.b32.xlu0 %v642, 32
    %v646 = vpop.permute.xlu0 %645
    %v648 = vmul.f32 %v641, %v646
    %650 = vrot.lane.b32.xlu0 %v648, 32
    %v651 = vpop.permute.xlu0 %650
    %v653 = vadd.f32 %v643, %v651
    %v654 = vtanh.pop %v653
    %656 = vrot.lane.b32.xlu0 %v654, 32
    %v657 = vpop.permute.xlu0 %656
    %v659 = vmul.f32 %v641, %v657
    %v660 = vld [vmem:[#allocation2 + $0x240] sm:$0xff]
    %v661 = vld [vmem:[#allocation2 + $0x248] sm:$0xff]
    %v662 = vld [vmem:[#allocation2 + $0x250] sm:$0xff]
    %v663 = vld [vmem:[#allocation2 + $0x258] sm:$0xff]
    %v664 = vld [vmem:[#allocation2 + $0x2e5] sm:$0x1]
    %v665 = vld [vmem:[#allocation2 + $0x260] sm:$0xff]
    %v666 = vld [vmem:[#allocation2 + $0x268] sm:$0xff]
    %v667 = vld [vmem:[#allocation2 + $0x270] sm:$0xff]
    %v668 = vld [vmem:[#allocation2 + $0x278] sm:$0xff]
    %v669 = vld [vmem:[#allocation2 + $0x280] sm:$0xff]
    %v670 = vld [vmem:[#allocation2 + $0x288] sm:$0xff]
    %v671 = vld [vmem:[#allocation2 + $0x290] sm:$0xff]
    %v672 = vld [vmem:[#allocation2 + $0x298] sm:$0xff]
    %v673 = vld [vmem:[#allocation2 + $0x2a0] sm:$0xff]
    %v674 = vld [vmem:[#allocation2 + $0x2a8] sm:$0xff]
    %v675 = vld [vmem:[#allocation2 + $0x2b0] sm:$0xff]
    %v676 = vld [vmem:[#allocation2 + $0x2b8] sm:$0xff]
    %v677 = vld [vmem:[#allocation2 + $0x2c0] sm:$0xff]
    %v678 = vld [vmem:[#allocation2 + $0x2c8] sm:$0xff]
    %v679 = vld [vmem:[#allocation2 + $0x2d0] sm:$0xff]
    %v680 = vld [vmem:[#allocation2 + $0x2d8] sm:$0xff]
    %v681 = vld [vmem:[#allocation2 + $0x2e6] sm:$0x1]
    %v682 = vlaneseq
    %v683 = vshrl.u32 %v682, 7
    %v684 = vsub.s32 0, %v683
    %v685 = vrot.slane %v664, %v684
    %687 = vrot.lane.b32.xlu0 %v659, 64
    %v688 = vpop.permute.xlu0 %687
    %v689 = vsel %vm123, %v688, 0
    %691 = vmatprep.subr.mxu0 0.0
    %692 = vmatpush1.msra.mxu0 %v660
    %693 = vmatprep.subr.mxu0 0.0
    %694 = vmatpush1.msra.mxu0 %v661
    %695 = vmatprep.subr.mxu0 0.0
    %696 = vmatpush1.msra.mxu0 %v662
    %697 = vmatprep.subr.mxu0 0.0
    %698 = vmatpush1.msra.mxu0 %v663
    %699 = vmatprep.subr.mxu0 0.0
    %700 = vmatpush1.msra.mxu0 0.0
    %701 = vmatprep.subr.mxu0 0.0
    %702 = vmatpush1.msra.mxu0 0.0
    %703 = vmatprep.subr.mxu0 0.0
    %704 = vmatpush1.msra.mxu0 0.0
    %705 = vmatprep.subr.mxu0 0.0
    %706 = vmatpush1.msra.mxu0 0.0
    %707 = vmatprep.subr.mxu0 0.0
    %708 = vmatpush1.msra.mxu0 0.0
    %709 = vmatprep.subr.mxu0 0.0
    %710 = vmatpush1.msra.mxu0 0.0
    %711 = vmatprep.subr.mxu0 0.0
    %712 = vmatpush1.msra.mxu0 0.0
    %713 = vmatprep.subr.mxu0 0.0
    %714 = vmatpush1.msra.mxu0 0.0
    %715 = vmatprep.subr.mxu0 0.0
    %716 = vmatpush1.msra.mxu0 0.0
    %717 = vmatprep.subr.mxu0 0.0
    %718 = vmatpush1.msra.mxu0 0.0
    %719 = vmatprep.subr.mxu0 0.0
    %720 = vmatpush1.msra.mxu0 0.0
    %721 = vmatprep.subr.mxu0 0.0
    %722 = vmatpush1.msra.mxu0 0.0
    %723 = vmatprep.subr.mxu0 0.0
    %724 = vmatpush1.msra.mxu0 0.0
    %725 = vmatprep.subr.mxu0 0.0
    %726 = vmatpush1.msra.mxu0 0.0
    %727 = vmatprep.subr.mxu0 0.0
    %728 = vmatpush1.msra.mxu0 0.0
    %729 = vmatprep.subr.mxu0 0.0
    %730 = vmatpush1.msra.mxu0 0.0
    %731 = vmatprep.subr.mxu0 0.0
    %732 = vmatpush1.msra.mxu0 0.0
    %733 = vmatprep.subr.mxu0 0.0
    %734 = vmatpush1.msra.mxu0 0.0
    %735 = vmatprep.subr.mxu0 0.0
    %736 = vmatpush1.msra.mxu0 0.0
    %737 = vmatprep.subr.mxu0 0.0
    %738 = vmatpush1.msra.mxu0 0.0
    %739 = vmatprep.subr.mxu0 0.0
    %740 = vmatpush1.msra.mxu0 0.0
    %741 = vmatprep.subr.mxu0 0.0
    %742 = vmatpush1.msra.mxu0 0.0
    %743 = vmatprep.subr.mxu0 0.0
    %744 = vmatpush1.msra.mxu0 0.0
    %745 = vmatprep.subr.mxu0 0.0
    %746 = vmatpush1.msra.mxu0 0.0
    %747 = vmatprep.subr.mxu0 0.0
    %748 = vmatpush1.msra.mxu0 0.0
    %749 = vmatprep.subr.mxu0 0.0
    %750 = vmatpush1.msra.mxu0 0.0
    %751 = vmatprep.subr.mxu0 0.0
    %752 = vmatpush1.msra.mxu0 0.0
    %753 = vmatprep.subr.mxu0 0.0
    %754 = vmatpush1.msra.mxu0 0.0
    %755 = vmatprep.mubr.f32.mxu0 0.0
    %756 = vmatmul.mubr.f32.gmra.mrb[0].mxu0 %v689
    %v757 = vpop.f32.mrb[0].mxu0
    %v758 = vadd.f32 %v685, %v757
    %v759 = vpop.f32.mrb[0].mxu0
    %760 = vdwg.mxu0
    %v761 = vtanh.pop %v758
    %v762 = vlaneseq
    %v763 = vshrl.u32 %v762, 7
    %v764 = vsub.s32 0, %v763
    %v765 = vrot.slane %v681, %v764
    %766 = vmatprep.subr.mxu0 0.0
    %767 = vmatpush1.msra.mxu0 %v665
    %768 = vmatprep.subr.mxu0 0.0
    %769 = vmatpush1.msra.mxu0 %v666
    %770 = vmatprep.subr.mxu0 0.0
    %771 = vmatpush1.msra.mxu0 %v667
    %772 = vmatprep.subr.mxu0 0.0
    %773 = vmatpush1.msra.mxu0 %v668
    %774 = vmatprep.subr.mxu0 0.0
    %775 = vmatpush1.msra.mxu0 %v669
    %776 = vmatprep.subr.mxu0 0.0
    %777 = vmatpush1.msra.mxu0 %v670
    %778 = vmatprep.subr.mxu0 0.0
    %779 = vmatpush1.msra.mxu0 %v671
    %780 = vmatprep.subr.mxu0 0.0
    %781 = vmatpush1.msra.mxu0 %v672
    %782 = vmatprep.subr.mxu0 0.0
    %783 = vmatpush1.msra.mxu0 %v673
    %784 = vmatprep.subr.mxu0 0.0
    %785 = vmatpush1.msra.mxu0 %v674
    %786 = vmatprep.subr.mxu0 0.0
    %787 = vmatpush1.msra.mxu0 %v675
    %788 = vmatprep.subr.mxu0 0.0
    %789 = vmatpush1.msra.mxu0 %v676
    %790 = vmatprep.subr.mxu0 0.0
    %791 = vmatpush1.msra.mxu0 %v677
    %792 = vmatprep.subr.mxu0 0.0
    %793 = vmatpush1.msra.mxu0 %v678
    %794 = vmatprep.subr.mxu0 0.0
    %795 = vmatpush1.msra.mxu0 %v679
    %796 = vmatprep.subr.mxu0 0.0
    %797 = vmatpush1.msra.mxu0 %v680
    %798 = vmatprep.subr.mxu0 0.0
    %799 = vmatpush1.msra.mxu0 0.0
    %800 = vmatprep.subr.mxu0 0.0
    %801 = vmatpush1.msra.mxu0 0.0
    %802 = vmatprep.subr.mxu0 0.0
    %803 = vmatpush1.msra.mxu0 0.0
    %804 = vmatprep.subr.mxu0 0.0
    %805 = vmatpush1.msra.mxu0 0.0
    %806 = vmatprep.subr.mxu0 0.0
    %807 = vmatpush1.msra.mxu0 0.0
    %808 = vmatprep.subr.mxu0 0.0
    %809 = vmatpush1.msra.mxu0 0.0
    %810 = vmatprep.subr.mxu0 0.0
    %811 = vmatpush1.msra.mxu0 0.0
    %812 = vmatprep.subr.mxu0 0.0
    %813 = vmatpush1.msra.mxu0 0.0
    %814 = vmatprep.subr.mxu0 0.0
    %815 = vmatpush1.msra.mxu0 0.0
    %816 = vmatprep.subr.mxu0 0.0
    %817 = vmatpush1.msra.mxu0 0.0
    %818 = vmatprep.subr.mxu0 0.0
    %819 = vmatpush1.msra.mxu0 0.0
    %820 = vmatprep.subr.mxu0 0.0
    %821 = vmatpush1.msra.mxu0 0.0
    %822 = vmatprep.subr.mxu0 0.0
    %823 = vmatpush1.msra.mxu0 0.0
    %824 = vmatprep.subr.mxu0 0.0
    %825 = vmatpush1.msra.mxu0 0.0
    %826 = vmatprep.subr.mxu0 0.0
    %827 = vmatpush1.msra.mxu0 0.0
    %828 = vmatprep.subr.mxu0 0.0
    %829 = vmatpush1.msra.mxu0 0.0
    %830 = vmatprep.mubr.f32.mxu0 0.0
    %831 = vmatmul.mubr.f32.gmra.mrb[0].mxu0 %v761
    %v832 = vpop.f32.mrb[0].mxu0
    %v833 = vadd.f32 %v765, %v832
    %v834 = vpop.f32.mrb[0].mxu0
    %835 = vdwg.mxu0
    %v836 = vtanh.pop %v833
    %v837 = vand.u32 2147483647, %v836
    %vm838 = vcmp.gt.f32.partialorder %v837, 4.539993e-05
    %v839 = vsel %vm838, 1, 0
    %v840 = vcvt.s32.f32 %v839
    %v841 = vadd.f32 %v837, 1e-06
    %v842 = vlog2.pop %v841
    %v843 = vmul.f32 %v842, 0.6931472
    %v844 = vmul.f32 %v843, %v507
    %v845 = vmul.f32 %v844, %v840
    %v846 = vsub.f32 1.0, %v840
    %v847 = vsub.f32 %v845, %v846
    %vm848 = vcmp.gt.f32.partialorder %v836, 0.0
    %vm849 = vcmp.lt.f32.partialorder %v836, 0.0
    %v850 = vsel %vm849, -1.0, 0.0
    %v851 = vsel %vm848, 1.0, %v850
    %v852 = vmul.f32 %v851, %v840
    %v853 = vmul.f32 %v836, 22026.465
    %v854 = vmul.f32 %v853, %v846
    %v855 = vadd.f32 %v852, %v854
    %857 = vrot.lane.b32.xlu0 %v855, 32
    %v858 = vpop.permute.xlu0 %857
    %v860 = vsel %vm123, %v847, %v858
    %v861 = vld [vmem:[#allocation2 + $0x1e0] sm:$0xff]
    %v862 = vld [vmem:[#allocation2 + $0x1e8] sm:$0xff]
    %v863 = vld [vmem:[#allocation2 + $0x1f0] sm:$0xff]
    %v864 = vld [vmem:[#allocation2 + $0x1f8] sm:$0xff]
    %v865 = vld [vmem:[#allocation2 + $0x200] sm:$0xff]
    %v866 = vld [vmem:[#allocation2 + $0x208] sm:$0xff]
    %v867 = vld [vmem:[#allocation2 + $0x210] sm:$0xff]
    %v868 = vld [vmem:[#allocation2 + $0x218] sm:$0xff]
    %v869 = vld [vmem:[#allocation2 + $0x220] sm:$0xff]
    %v870 = vld [vmem:[#allocation2 + $0x228] sm:$0xff]
    %v871 = vld [vmem:[#allocation2 + $0x230] sm:$0xff]
    %v872 = vld [vmem:[#allocation2 + $0x238] sm:$0xff]
    %v873 = vld [vmem:[#allocation2 + $0x2e4] sm:$0x1]
    %v874 = vsel %vm129, %v860, %v659
    %v875 = vlaneseq
    %v876 = vshrl.u32 %v875, 7
    %v877 = vsub.s32 0, %v876
    %v878 = vrot.slane %v873, %v877
    %v880 = vsel %vm562, %v874, 0
    %882 = vmatprep.subr.mxu0 0.0
    %883 = vmatpush1.msra.mxu0 %v861
    %884 = vmatprep.subr.mxu0 0.0
    %885 = vmatpush1.msra.mxu0 %v862
    %886 = vmatprep.subr.mxu0 0.0
    %887 = vmatpush1.msra.mxu0 %v863
    %888 = vmatprep.subr.mxu0 0.0
    %889 = vmatpush1.msra.mxu0 %v864
    %890 = vmatprep.subr.mxu0 0.0
    %891 = vmatpush1.msra.mxu0 %v865
    %892 = vmatprep.subr.mxu0 0.0
    %893 = vmatpush1.msra.mxu0 %v866
    %894 = vmatprep.subr.mxu0 0.0
    %895 = vmatpush1.msra.mxu0 %v867
    %896 = vmatprep.subr.mxu0 0.0
    %897 = vmatpush1.msra.mxu0 %v868
    %898 = vmatprep.subr.mxu0 0.0
    %899 = vmatpush1.msra.mxu0 %v869
    %900 = vmatprep.subr.mxu0 0.0
    %901 = vmatpush1.msra.mxu0 %v870
    %902 = vmatprep.subr.mxu0 0.0
    %903 = vmatpush1.msra.mxu0 %v871
    %904 = vmatprep.subr.mxu0 0.0
    %905 = vmatpush1.msra.mxu0 %v872
    %906 = vmatprep.subr.mxu0 0.0
    %907 = vmatpush1.msra.mxu0 0.0
    %908 = vmatprep.subr.mxu0 0.0
    %909 = vmatpush1.msra.mxu0 0.0
    %910 = vmatprep.subr.mxu0 0.0
    %911 = vmatpush1.msra.mxu0 0.0
    %912 = vmatprep.subr.mxu0 0.0
    %913 = vmatpush1.msra.mxu0 0.0
    %914 = vmatprep.subr.mxu0 0.0
    %915 = vmatpush1.msra.mxu0 0.0
    %916 = vmatprep.subr.mxu0 0.0
    %917 = vmatpush1.msra.mxu0 0.0
    %918 = vmatprep.subr.mxu0 0.0
    %919 = vmatpush1.msra.mxu0 0.0
    %920 = vmatprep.subr.mxu0 0.0
    %921 = vmatpush1.msra.mxu0 0.0
    %922 = vmatprep.subr.mxu0 0.0
    %923 = vmatpush1.msra.mxu0 0.0
    %924 = vmatprep.subr.mxu0 0.0
    %925 = vmatpush1.msra.mxu0 0.0
    %926 = vmatprep.subr.mxu0 0.0
    %927 = vmatpush1.msra.mxu0 0.0
    %928 = vmatprep.subr.mxu0 0.0
    %929 = vmatpush1.msra.mxu0 0.0
    %930 = vmatprep.subr.mxu0 0.0
    %931 = vmatpush1.msra.mxu0 0.0
    %932 = vmatprep.subr.mxu0 0.0
    %933 = vmatpush1.msra.mxu0 0.0
    %934 = vmatprep.subr.mxu0 0.0
    %935 = vmatpush1.msra.mxu0 0.0
    %936 = vmatprep.subr.mxu0 0.0
    %937 = vmatpush1.msra.mxu0 0.0
    %938 = vmatprep.subr.mxu0 0.0
    %939 = vmatpush1.msra.mxu0 0.0
    %940 = vmatprep.subr.mxu0 0.0
    %941 = vmatpush1.msra.mxu0 0.0
    %942 = vmatprep.subr.mxu0 0.0
    %943 = vmatpush1.msra.mxu0 0.0
    %944 = vmatprep.subr.mxu0 0.0
    %945 = vmatpush1.msra.mxu0 0.0
    %946 = vmatprep.mubr.f32.mxu0 0.0
    %947 = vmatmul.mubr.f32.gmra.mrb[0].mxu0 %v880
    %v948 = vpop.f32.mrb[0].mxu0
    %v949 = vadd.f32 %v878, %v948
    %v950 = vpop.f32.mrb[0].mxu0
    %951 = vdwg.mxu0
    %v952 = vxor.u32 %v949, 2147483648
    %v953 = vmul.f32 %v952, 1.442695
    %v954 = vpow.pop %v953
    %v955 = vadd.f32 %v954, 1.0
    %v956 = vrcp.pop %v955
    %v957 = vmul.f32 1.0, %v956
    %v958 = vtanh.pop %v949
    %v959 = vmul.f32 %v957, %v653
    %961 = vrot.lane.b32.xlu0 %v958, 32
    %v962 = vpop.permute.xlu0 %961
    %v964 = vmul.f32 %v957, %v962
    %966 = vrot.lane.b32.xlu0 %v964, 32
    %v967 = vpop.permute.xlu0 %966
    %v969 = vadd.f32 %v959, %v967
    %v970 = vtanh.pop %v969
    %972 = vrot.lane.b32.xlu0 %v970, 32
    %v973 = vpop.permute.xlu0 %972
    %v975 = vmul.f32 %v957, %v973
    %977 = vrot.lane.b32.xlu0 %v975, 64
    %v978 = vpop.permute.xlu0 %977
    %980 = vmatprep.subr.mxu0 0.0
    %981 = vmatpush1.msra.mxu0 %v978
    %982 = vmatprep.subr.mxu0 0.0
    %983 = vmatpush1.msra.mxu0 0.0
    %984 = vmatprep.subr.mxu0 0.0
    %985 = vmatpush1.msra.mxu0 0.0
    %986 = vmatprep.subr.mxu0 0.0
    %987 = vmatpush1.msra.mxu0 0.0
    %988 = vmatprep.subr.mxu0 0.0
    %989 = vmatpush1.msra.mxu0 0.0
    %990 = vmatprep.subr.mxu0 0.0
    %991 = vmatpush1.msra.mxu0 0.0
    %992 = vmatprep.subr.mxu0 0.0
    %993 = vmatpush1.msra.mxu0 0.0
    %994 = vmatprep.subr.mxu0 0.0
    %995 = vmatpush1.msra.mxu0 0.0
    %996 = vmatprep.subr.mxu0 0.0
    %997 = vmatpush1.msra.mxu0 0.0
    %998 = vmatprep.subr.mxu0 0.0
    %999 = vmatpush1.msra.mxu0 0.0
    %1000 = vmatprep.subr.mxu0 0.0
    %1001 = vmatpush1.msra.mxu0 0.0
    %1002 = vmatprep.subr.mxu0 0.0
    %1003 = vmatpush1.msra.mxu0 0.0
    %1004 = vmatprep.subr.mxu0 0.0
    %1005 = vmatpush1.msra.mxu0 0.0
    %1006 = vmatprep.subr.mxu0 0.0
    %1007 = vmatpush1.msra.mxu0 0.0
    %1008 = vmatprep.subr.mxu0 0.0
    %1009 = vmatpush1.msra.mxu0 0.0
    %1010 = vmatprep.subr.mxu0 0.0
    %1011 = vmatpush1.msra.mxu0 0.0
    %1012 = vmatprep.subr.mxu0 0.0
    %1013 = vmatpush1.msra.mxu0 0.0
    %1014 = vmatprep.subr.mxu0 0.0
    %1015 = vmatpush1.msra.mxu0 0.0
    %1016 = vmatprep.subr.mxu0 0.0
    %1017 = vmatpush1.msra.mxu0 0.0
    %1018 = vmatprep.subr.mxu0 0.0
    %1019 = vmatpush1.msra.mxu0 0.0
    %1020 = vmatprep.subr.mxu0 0.0
    %1021 = vmatpush1.msra.mxu0 0.0
    %1022 = vmatprep.subr.mxu0 0.0
    %1023 = vmatpush1.msra.mxu0 0.0
    %1024 = vmatprep.subr.mxu0 0.0
    %1025 = vmatpush1.msra.mxu0 0.0
    %1026 = vmatprep.subr.mxu0 0.0
    %1027 = vmatpush1.msra.mxu0 0.0
    %1028 = vmatprep.subr.mxu0 0.0
    %1029 = vmatpush1.msra.mxu0 0.0
    %1030 = vmatprep.subr.mxu0 0.0
    %1031 = vmatpush1.msra.mxu0 0.0
    %1032 = vmatprep.subr.mxu0 0.0
    %1033 = vmatpush1.msra.mxu0 0.0
    %1034 = vmatprep.subr.mxu0 0.0
    %1035 = vmatpush1.msra.mxu0 0.0
    %1036 = vmatprep.subr.mxu0 0.0
    %1037 = vmatpush1.msra.mxu0 0.0
    %1038 = vmatprep.subr.mxu0 0.0
    %1039 = vmatpush1.msra.mxu0 0.0
    %1040 = vmatprep.subr.mxu0 0.0
    %1041 = vmatpush1.msra.mxu0 0.0
    %1042 = vmatprep.subr.mxu0 0.0
    %1043 = vmatpush1.msra.mxu0 0.0
    %1044 = vmatprep.mubr.f32.mxu0 0.0
    %1045 = vmatmul.mubr.f32.gmra.mrb[0].mxu0 %v46
    %v1046 = vpop.f32.mrb[0].mxu0
    %v1047 = vadd.f32 0.0, %v1046
    %v1048 = vpop.f32.mrb[0].mxu0
    %1049 = vdwg.mxu0
    %v1050 = vrot.slane %v406, 4
    %v1052 = vsel %vm413, %v406, %v1050
    %v1054 = vrot.slane %v1047, 4
    %v1056 = vsel %vm413, %v1054, %v1054
    %v1057 = vmul.f32 %v1052, %v1056
    %v1058 = vld [vmem:[#allocation2 + $0x300] sm:$0xff]
    %v1059 = vld [vmem:[#allocation2 + $0x308] sm:$0xff]
    %v1061 = vsel %vm44, %v1059, 0
    %1063 = vmatprep.subr.mxu0 0.0
    %1064 = vmatpush1.msra.mxu0 %v1057
    %1065 = vmatprep.subr.mxu0 0.0
    %1066 = vmatpush1.msra.mxu0 0.0
    %1067 = vmatprep.subr.mxu0 0.0
    %1068 = vmatpush1.msra.mxu0 0.0
    %1069 = vmatprep.subr.mxu0 0.0
    %1070 = vmatpush1.msra.mxu0 0.0
    %1071 = vmatprep.subr.mxu0 0.0
    %1072 = vmatpush1.msra.mxu0 0.0
    %1073 = vmatprep.subr.mxu0 0.0
    %1074 = vmatpush1.msra.mxu0 0.0
    %1075 = vmatprep.subr.mxu0 0.0
    %1076 = vmatpush1.msra.mxu0 0.0
    %1077 = vmatprep.subr.mxu0 0.0
    %1078 = vmatpush1.msra.mxu0 0.0
    %1079 = vmatprep.subr.mxu0 0.0
    %1080 = vmatpush1.msra.mxu0 0.0
    %1081 = vmatprep.subr.mxu0 0.0
    %1082 = vmatpush1.msra.mxu0 0.0
    %1083 = vmatprep.subr.mxu0 0.0
    %1084 = vmatpush1.msra.mxu0 0.0
    %1085 = vmatprep.subr.mxu0 0.0
    %1086 = vmatpush1.msra.mxu0 0.0
    %1087 = vmatprep.subr.mxu0 0.0
    %1088 = vmatpush1.msra.mxu0 0.0
    %1089 = vmatprep.subr.mxu0 0.0
    %1090 = vmatpush1.msra.mxu0 0.0
    %1091 = vmatprep.subr.mxu0 0.0
    %1092 = vmatpush1.msra.mxu0 0.0
    %1093 = vmatprep.subr.mxu0 0.0
    %1094 = vmatpush1.msra.mxu0 0.0
    %1095 = vmatprep.subr.mxu0 0.0
    %1096 = vmatpush1.msra.mxu0 0.0
    %1097 = vmatprep.subr.mxu0 0.0
    %1098 = vmatpush1.msra.mxu0 0.0
    %1099 = vmatprep.subr.mxu0 0.0
    %1100 = vmatpush1.msra.mxu0 0.0
    %1101 = vmatprep.subr.mxu0 0.0
    %1102 = vmatpush1.msra.mxu0 0.0
    %1103 = vmatprep.subr.mxu0 0.0
    %1104 = vmatpush1.msra.mxu0 0.0
    %1105 = vmatprep.subr.mxu0 0.0
    %1106 = vmatpush1.msra.mxu0 0.0
    %1107 = vmatprep.subr.mxu0 0.0
    %1108 = vmatpush1.msra.mxu0 0.0
    %1109 = vmatprep.subr.mxu0 0.0
    %1110 = vmatpush1.msra.mxu0 0.0
    %1111 = vmatprep.subr.mxu0 0.0
    %1112 = vmatpush1.msra.mxu0 0.0
    %1113 = vmatprep.subr.mxu0 0.0
    %1114 = vmatpush1.msra.mxu0 0.0
    %1115 = vmatprep.subr.mxu0 0.0
    %1116 = vmatpush1.msra.mxu0 0.0
    %1117 = vmatprep.subr.mxu0 0.0
    %1118 = vmatpush1.msra.mxu0 0.0
    %1119 = vmatprep.subr.mxu0 0.0
    %1120 = vmatpush1.msra.mxu0 0.0
    %1121 = vmatprep.subr.mxu0 0.0
    %1122 = vmatpush1.msra.mxu0 0.0
    %1123 = vmatprep.subr.mxu0 0.0
    %1124 = vmatpush1.msra.mxu0 0.0
    %1125 = vmatprep.subr.mxu0 0.0
    %1126 = vmatpush1.msra.mxu0 0.0
    %1127 = vmatprep.mubr.f32.mxu0 0.0
    %1128 = vmatmul.mubr.f32.gmra.mrb[0].mxu0 %v1061
    %v1129 = vpop.f32.mrb[0].mxu0
    %v1130 = vadd.f32 0.0, %v1129
    %v1131 = vpop.f32.mrb[0].mxu0
    %1132 = vdwg.mxu0
    %v1134 = vsel %vm44, %v1058, 0
    %1136 = vmatprep.subr.mxu0 0.0
    %1137 = vmatpush1.msra.mxu0 %v978
    %1138 = vmatprep.subr.mxu0 0.0
    %1139 = vmatpush1.msra.mxu0 0.0
    %1140 = vmatprep.subr.mxu0 0.0
    %1141 = vmatpush1.msra.mxu0 0.0
    %1142 = vmatprep.subr.mxu0 0.0
    %1143 = vmatpush1.msra.mxu0 0.0
    %1144 = vmatprep.subr.mxu0 0.0
    %1145 = vmatpush1.msra.mxu0 0.0
    %1146 = vmatprep.subr.mxu0 0.0
    %1147 = vmatpush1.msra.mxu0 0.0
    %1148 = vmatprep.subr.mxu0 0.0
    %1149 = vmatpush1.msra.mxu0 0.0
    %1150 = vmatprep.subr.mxu0 0.0
    %1151 = vmatpush1.msra.mxu0 0.0
    %1152 = vmatprep.subr.mxu0 0.0
    %1153 = vmatpush1.msra.mxu0 0.0
    %1154 = vmatprep.subr.mxu0 0.0
    %1155 = vmatpush1.msra.mxu0 0.0
    %1156 = vmatprep.subr.mxu0 0.0
    %1157 = vmatpush1.msra.mxu0 0.0
    %1158 = vmatprep.subr.mxu0 0.0
    %1159 = vmatpush1.msra.mxu0 0.0
    %1160 = vmatprep.subr.mxu0 0.0
    %1161 = vmatpush1.msra.mxu0 0.0
    %1162 = vmatprep.subr.mxu0 0.0
    %1163 = vmatpush1.msra.mxu0 0.0
    %1164 = vmatprep.subr.mxu0 0.0
    %1165 = vmatpush1.msra.mxu0 0.0
    %1166 = vmatprep.subr.mxu0 0.0
    %1167 = vmatpush1.msra.mxu0 0.0
    %1168 = vmatprep.subr.mxu0 0.0
    %1169 = vmatpush1.msra.mxu0 0.0
    %1170 = vmatprep.subr.mxu0 0.0
    %1171 = vmatpush1.msra.mxu0 0.0
    %1172 = vmatprep.subr.mxu0 0.0
    %1173 = vmatpush1.msra.mxu0 0.0
    %1174 = vmatprep.subr.mxu0 0.0
    %1175 = vmatpush1.msra.mxu0 0.0
    %1176 = vmatprep.subr.mxu0 0.0
    %1177 = vmatpush1.msra.mxu0 0.0
    %1178 = vmatprep.subr.mxu0 0.0
    %1179 = vmatpush1.msra.mxu0 0.0
    %1180 = vmatprep.subr.mxu0 0.0
    %1181 = vmatpush1.msra.mxu0 0.0
    %1182 = vmatprep.subr.mxu0 0.0
    %1183 = vmatpush1.msra.mxu0 0.0
    %1184 = vmatprep.subr.mxu0 0.0
    %1185 = vmatpush1.msra.mxu0 0.0
    %1186 = vmatprep.subr.mxu0 0.0
    %1187 = vmatpush1.msra.mxu0 0.0
    %1188 = vmatprep.subr.mxu0 0.0
    %1189 = vmatpush1.msra.mxu0 0.0
    %1190 = vmatprep.subr.mxu0 0.0
    %1191 = vmatpush1.msra.mxu0 0.0
    %1192 = vmatprep.subr.mxu0 0.0
    %1193 = vmatpush1.msra.mxu0 0.0
    %1194 = vmatprep.subr.mxu0 0.0
    %1195 = vmatpush1.msra.mxu0 0.0
    %1196 = vmatprep.subr.mxu0 0.0
    %1197 = vmatpush1.msra.mxu0 0.0
    %1198 = vmatprep.subr.mxu0 0.0
    %1199 = vmatpush1.msra.mxu0 0.0
    %1200 = vmatprep.mubr.f32.mxu0 0.0
    %1201 = vmatmul.mubr.f32.gmra.mrb[0].mxu0 %v1134
    %v1202 = vpop.f32.mrb[0].mxu0
    %v1203 = vadd.f32 %v1130, %v1202
    %v1204 = vpop.f32.mrb[0].mxu0
    %1205 = vdwg.mxu0
    %v1206 = vmul.f32 %v1203, 0.5
    %v1208 = vsel %vm123, %v1206, 0
    %1210 = vmatprep.subr.mxu0 0.0
    %1211 = vmatpush1.msra.mxu0 %v660
    %1212 = vmatprep.subr.mxu0 0.0
    %1213 = vmatpush1.msra.mxu0 %v661
    %1214 = vmatprep.subr.mxu0 0.0
    %1215 = vmatpush1.msra.mxu0 %v662
    %1216 = vmatprep.subr.mxu0 0.0
    %1217 = vmatpush1.msra.mxu0 %v663
    %1218 = vmatprep.subr.mxu0 0.0
    %1219 = vmatpush1.msra.mxu0 0.0
    %1220 = vmatprep.subr.mxu0 0.0
    %1221 = vmatpush1.msra.mxu0 0.0
    %1222 = vmatprep.subr.mxu0 0.0
    %1223 = vmatpush1.msra.mxu0 0.0
    %1224 = vmatprep.subr.mxu0 0.0
    %1225 = vmatpush1.msra.mxu0 0.0
    %1226 = vmatprep.subr.mxu0 0.0
    %1227 = vmatpush1.msra.mxu0 0.0
    %1228 = vmatprep.subr.mxu0 0.0
    %1229 = vmatpush1.msra.mxu0 0.0
    %1230 = vmatprep.subr.mxu0 0.0
    %1231 = vmatpush1.msra.mxu0 0.0
    %1232 = vmatprep.subr.mxu0 0.0
    %1233 = vmatpush1.msra.mxu0 0.0
    %1234 = vmatprep.subr.mxu0 0.0
    %1235 = vmatpush1.msra.mxu0 0.0
    %1236 = vmatprep.subr.mxu0 0.0
    %1237 = vmatpush1.msra.mxu0 0.0
    %1238 = vmatprep.subr.mxu0 0.0
    %1239 = vmatpush1.msra.mxu0 0.0
    %1240 = vmatprep.subr.mxu0 0.0
    %1241 = vmatpush1.msra.mxu0 0.0
    %1242 = vmatprep.subr.mxu0 0.0
    %1243 = vmatpush1.msra.mxu0 0.0
    %1244 = vmatprep.subr.mxu0 0.0
    %1245 = vmatpush1.msra.mxu0 0.0
    %1246 = vmatprep.subr.mxu0 0.0
    %1247 = vmatpush1.msra.mxu0 0.0
    %1248 = vmatprep.subr.mxu0 0.0
    %1249 = vmatpush1.msra.mxu0 0.0
    %1250 = vmatprep.subr.mxu0 0.0
    %1251 = vmatpush1.msra.mxu0 0.0
    %1252 = vmatprep.subr.mxu0 0.0
    %1253 = vmatpush1.msra.mxu0 0.0
    %1254 = vmatprep.subr.mxu0 0.0
    %1255 = vmatpush1.msra.mxu0 0.0
    %1256 = vmatprep.subr.mxu0 0.0
    %1257 = vmatpush1.msra.mxu0 0.0
    %1258 = vmatprep.subr.mxu0 0.0
    %1259 = vmatpush1.msra.mxu0 0.0
    %1260 = vmatprep.subr.mxu0 0.0
    %1261 = vmatpush1.msra.mxu0 0.0
    %1262 = vmatprep.subr.mxu0 0.0
    %1263 = vmatpush1.msra.mxu0 0.0
    %1264 = vmatprep.subr.mxu0 0.0
    %1265 = vmatpush1.msra.mxu0 0.0
    %1266 = vmatprep.subr.mxu0 0.0
    %1267 = vmatpush1.msra.mxu0 0.0
    %1268 = vmatprep.subr.mxu0 0.0
    %1269 = vmatpush1.msra.mxu0 0.0
    %1270 = vmatprep.subr.mxu0 0.0
    %1271 = vmatpush1.msra.mxu0 0.0
    %1272 = vmatprep.subr.mxu0 0.0
    %1273 = vmatpush1.msra.mxu0 0.0
    %1274 = vmatprep.mubr.f32.mxu0 0.0
    %1275 = vmatmul.mubr.f32.gmra.mrb[0].mxu0 %v1208
    %v1276 = vpop.f32.mrb[0].mxu0
    %v1277 = vadd.f32 %v685, %v1276
    %v1278 = vpop.f32.mrb[0].mxu0
    %1279 = vdwg.mxu0
    %v1280 = vtanh.pop %v1277
    %1281 = vmatprep.subr.mxu0 0.0
    %1282 = vmatpush1.msra.mxu0 %v665
    %1283 = vmatprep.subr.mxu0 0.0
    %1284 = vmatpush1.msra.mxu0 %v666
    %1285 = vmatprep.subr.mxu0 0.0
    %1286 = vmatpush1.msra.mxu0 %v667
    %1287 = vmatprep.subr.mxu0 0.0
    %1288 = vmatpush1.msra.mxu0 %v668
    %1289 = vmatprep.subr.mxu0 0.0
    %1290 = vmatpush1.msra.mxu0 %v669
    %1291 = vmatprep.subr.mxu0 0.0
    %1292 = vmatpush1.msra.mxu0 %v670
    %1293 = vmatprep.subr.mxu0 0.0
    %1294 = vmatpush1.msra.mxu0 %v671
    %1295 = vmatprep.subr.mxu0 0.0
    %1296 = vmatpush1.msra.mxu0 %v672
    %1297 = vmatprep.subr.mxu0 0.0
    %1298 = vmatpush1.msra.mxu0 %v673
    %1299 = vmatprep.subr.mxu0 0.0
    %1300 = vmatpush1.msra.mxu0 %v674
    %1301 = vmatprep.subr.mxu0 0.0
    %1302 = vmatpush1.msra.mxu0 %v675
    %1303 = vmatprep.subr.mxu0 0.0
    %1304 = vmatpush1.msra.mxu0 %v676
    %1305 = vmatprep.subr.mxu0 0.0
    %1306 = vmatpush1.msra.mxu0 %v677
    %1307 = vmatprep.subr.mxu0 0.0
    %1308 = vmatpush1.msra.mxu0 %v678
    %1309 = vmatprep.subr.mxu0 0.0
    %1310 = vmatpush1.msra.mxu0 %v679
    %1311 = vmatprep.subr.mxu0 0.0
    %1312 = vmatpush1.msra.mxu0 %v680
    %1313 = vmatprep.subr.mxu0 0.0
    %1314 = vmatpush1.msra.mxu0 0.0
    %1315 = vmatprep.subr.mxu0 0.0
    %1316 = vmatpush1.msra.mxu0 0.0
    %1317 = vmatprep.subr.mxu0 0.0
    %1318 = vmatpush1.msra.mxu0 0.0
    %1319 = vmatprep.subr.mxu0 0.0
    %1320 = vmatpush1.msra.mxu0 0.0
    %1321 = vmatprep.subr.mxu0 0.0
    %1322 = vmatpush1.msra.mxu0 0.0
    %1323 = vmatprep.subr.mxu0 0.0
    %1324 = vmatpush1.msra.mxu0 0.0
    %1325 = vmatprep.subr.mxu0 0.0
    %1326 = vmatpush1.msra.mxu0 0.0
    %1327 = vmatprep.subr.mxu0 0.0
    %1328 = vmatpush1.msra.mxu0 0.0
    %1329 = vmatprep.subr.mxu0 0.0
    %1330 = vmatpush1.msra.mxu0 0.0
    %1331 = vmatprep.subr.mxu0 0.0
    %1332 = vmatpush1.msra.mxu0 0.0
    %1333 = vmatprep.subr.mxu0 0.0
    %1334 = vmatpush1.msra.mxu0 0.0
    %1335 = vmatprep.subr.mxu0 0.0
    %1336 = vmatpush1.msra.mxu0 0.0
    %1337 = vmatprep.subr.mxu0 0.0
    %1338 = vmatpush1.msra.mxu0 0.0
    %1339 = vmatprep.subr.mxu0 0.0
    %1340 = vmatpush1.msra.mxu0 0.0
    %1341 = vmatprep.subr.mxu0 0.0
    %1342 = vmatpush1.msra.mxu0 0.0
    %1343 = vmatprep.subr.mxu0 0.0
    %1344 = vmatpush1.msra.mxu0 0.0
    %1345 = vmatprep.mubr.f32.mxu0 0.0
    %1346 = vmatmul.mubr.f32.gmra.mrb[0].mxu0 %v1280
    %v1347 = vpop.f32.mrb[0].mxu0
    %v1348 = vadd.f32 %v765, %v1347
    %v1349 = vpop.f32.mrb[0].mxu0
    %1350 = vdwg.mxu0
    %v1351 = vtanh.pop %v1348
    %v1352 = vrot.slane %v1206, 4
    %v1354 = vsel %vm413, %v1351, %v1352
    %v1355 = vsel %vm413, %v969, 0.0
    %1357 = vrot.lane.b32.xlu0 %v497, 32
    %v1358 = vpop.permute.xlu0 %1357
    %1361 = vrot.lane.b32.xlu0 %v1354, 64
    %v1362 = vpop.permute.xlu0 %1361
    %1365 = vrot.lane.b32.xlu0 %v1355, 64
    %v1366 = vpop.permute.xlu0 %1365
    %v1368 = vsel %vm123, %v492, %v1358
    %v1369 = vsel %vm129, %v1368, %v1362
    %v1370 = vsel %vm562, %v1369, %v1366
    %1371 = vst [vmem:[#allocation7] sm:$0xff] %v1370
    // Predicated region
    $region18: #{tpu_custom_call.1} parent=1 // pred_check
      _
    $region19: #{tpu_custom_call.1} parent=1 // pred_check_branch
      %1373 = sbr.rel (0) target = $region21
    $region20: #{tpu_custom_call.1} parent=1 // pred_region
      %s1375 = ssub.s32 128, 128
      %1376 = vsyncadd [#allocation4], %s1375
      %s1378 = sshll.u32 [#allocation7], 4
      %s1379 = int_to_ptr.vmem [resolvable:$true] %s1378
      %1381 = dma.vmem_to_hbm [thread:$0]  %s1379, 128, %s2, [#allocation4]
    $region21: #{tpu_custom_call.1} parent=1 // pred_fallthru
      _
    // Predicated region
    $region22: #{tpu_custom_call.1} parent=1 // pred_check
      _
    $region23: #{tpu_custom_call.1} parent=1 // pred_check_branch
      %1383 = sbr.rel (0) target = $region25
    $region24: #{tpu_custom_call.1} parent=1 // pred_region
      %1384 = dma.done [#allocation4], 128
    $region25: #{tpu_custom_call.1} parent=1 // pred_fallthru
      _
    %1385 = vsyncpa [#allocation3], 1
    %1386 = vsyncpa [#allocation6], 1
    %1387 = vsyncpa [#allocation4], 1

</llo_original>
